<compile_context>
chip_gen: v7x
topology: tpu7x:2x2x1
jax: 0.10.0
libtpu: 0.0.40
codegen_flags: <defaults>
</compile_context>

<pallas_src>
import functools
import math

import jax
import jax.numpy as jnp
from jax.experimental import pallas as pl
from jax.experimental.pallas import tpu as pltpu


def _layer_norm(y, gamma, beta, eps=1e-5):
    mu = jnp.mean(y, axis=-1, keepdims=True)
    var = jnp.mean((y - mu) ** 2, axis=-1, keepdims=True)
    return (y - mu) * jax.lax.rsqrt(var + eps) * gamma + beta


def _gelu_exact(y):
    # PyTorch nn.GELU() default = exact erf formulation.
    return 0.5 * y * (1.0 + jax.lax.erf(y * (1.0 / math.sqrt(2.0))))


def _tpu_generation():
    """Generation-aware knobs: (mxu row/lane target, VMEM budget, multi-core?)."""
    try:
        kind = jax.devices()[0].device_kind.lower().replace(" ", "")
    except Exception:  # pragma: no cover - defensive
        kind = ""
    if "v5lite" in kind or "v5e" in kind:
        return {"mxu": 128, "vmem_budget": 100 * 2 ** 20, "multi_core": False}
    if "v6" in kind or "trillium" in kind:
        return {"mxu": 256, "vmem_budget": 100 * 2 ** 20, "multi_core": False}
    if "v7" in kind:
        return {"mxu": 256, "vmem_budget": 48 * 2 ** 20, "multi_core": True}
    if "v4" in kind or "v5p" in kind or "v5" in kind:
        return {"mxu": 128, "vmem_budget": 48 * 2 ** 20, "multi_core": True}
    return {"mxu": 256, "vmem_budget": 48 * 2 ** 20, "multi_core": False}


def _encoder_block_kernel(
    x_ref,
    wqkv_ref, bqkv_ref,
    wp_ref, bp_ref,
    gamma_ref, beta_ref,
    w1_ref, b1_ref, w2_ref, b2_ref,
    o_ref,
    acc_ref, xc_ref, z_ref,
    *, heads_per_group, head_dim, block_b, seq_len, emb,
    compute_dtype, ffn_chunk, n_ffn_chunks, approx_recip,
):
    g = pl.program_id(1)
    gw = heads_per_group * head_dim
    n_rows = block_b * seq_len
    scale = jnp.float32(1.0 / math.sqrt(emb))   # module scales by sqrt(n_embeddings)

    # Per-batch-block prologue: cast x once, seed the projection accumulator with its bias.
    @pl.when(g == 0)
    def _prologue():
        xc_ref[...] = x_ref[...].astype(compute_dtype)
        acc_ref[...] = jnp.broadcast_to(bp_ref[...].astype(jnp.float32), acc_ref.shape)

    xc = xc_ref[...]

    # Fused Q/K/V for this head group: one wide (n_rows, C) x (C, 3*gw) MXU matmul.
    qkv = jnp.dot(xc, wqkv_ref[0], preferred_element_type=jnp.float32) + bqkv_ref[0]
    q = qkv[:, 0:gw] * scale                    # fold 1/sqrt(C) into q once
    k = qkv[:, gw:2 * gw]
    v = qkv[:, 2 * gw:3 * gw]

    # Attention per head of the group (static unroll; T x T matmuls are small).
    for hl in range(heads_per_group):
        lo = hl * head_dim
        qh = q[:, lo:lo + head_dim].reshape(block_b, seq_len, head_dim).astype(compute_dtype)
        kh = k[:, lo:lo + head_dim].reshape(block_b, seq_len, head_dim).astype(compute_dtype)
        vh = v[:, lo:lo + head_dim].reshape(block_b, seq_len, head_dim).astype(compute_dtype)

        s = jnp.einsum("bqd,bkd->bqk", qh, kh, preferred_element_type=jnp.float32)
        s = s - jnp.max(s, axis=-1, keepdims=True)
        e = jnp.exp(s)
        p = e * pl.reciprocal(jnp.sum(e, axis=-1, keepdims=True), approx=approx_recip)
        zh = jnp.einsum("bqk,bkd->bqd", p.astype(compute_dtype), vh,
                        preferred_element_type=jnp.float32)
        z_ref[:, lo:lo + head_dim] = zh.reshape(n_rows, head_dim).astype(compute_dtype)

    # One lane-dense (n_rows, gw) x (gw, C) projection matmul, accumulated across groups.
    acc_ref[...] += jnp.dot(z_ref[...], wp_ref[0], preferred_element_type=jnp.float32)

    @pl.when(g == pl.num_programs(1) - 1)
    def _finalize():
        gamma = gamma_ref[...]
        beta = beta_ref[...]
        xf = x_ref[...].astype(jnp.float32)

        x1 = xf + _layer_norm(acc_ref[...], gamma, beta)          # residual 1
        x1c = x1.astype(compute_dtype)

        # FFN: chunk the 4C hidden dim so the f32 h1 slab stays <= (n_rows, ffn_chunk).
        y = jnp.broadcast_to(b2_ref[...].astype(jnp.float32), x1.shape)
        for c in range(n_ffn_chunks):
            lo = c * ffn_chunk
            h1 = jnp.dot(x1c, w1_ref[:, lo:lo + ffn_chunk],
                         preferred_element_type=jnp.float32) + b1_ref[:, lo:lo + ffn_chunk]
            h1 = _gelu_exact(h1)
            y = y + jnp.dot(h1.astype(compute_dtype), w2_ref[lo:lo + ffn_chunk, :],
                            preferred_element_type=jnp.float32)

        x2 = x1 + _layer_norm(y, gamma, beta)                     # residual 2 (same LN)
        o_ref[...] = x2.astype(o_ref.dtype)


def encoder_block_pallas(x, params, n_heads, *, compute_dtype=jnp.bfloat16,
                         block_b=None, heads_per_group=None):
    """x: (B, T, C) f32.  params use (in, out) weight layout (transposed vs torch Linear)."""
    B, T, C = x.shape
    assert C % n_heads == 0, "n_embeddings must divide evenly into heads"
    hd = C // n_heads
    (wq, bq, wk, bk, wv, bv, wp, bp, gamma, beta, w1, b1, w2, b2) = params

    info = _tpu_generation()
    budget = info["vmem_budget"]
    isz = jnp.dtype(compute_dtype).itemsize
    f32 = jnp.float32

    # ---- head grouping: largest G (divisor of n_heads) whose streamed per-group weight
    # stacks (double-buffered) fit a fraction of the VMEM budget.  For small C this gives
    # G = n_heads (the head axis collapses to one step).
    if heads_per_group is None:
        weight_budget = int(0.30 * budget)
        G = 1
        for d in range(1, n_heads + 1):
            if n_heads % d == 0 and 8 * C * d * hd * isz <= weight_budget:
                G = d
    else:
        G = heads_per_group
    assert n_heads % G == 0
    NG = n_heads // G
    gw = G * hd

    # ---- FFN hidden chunking: keep the f32 h1 intermediate <= (n_rows, max_chunk).
    ffn = 4 * C
    max_chunk = 2048 if budget > 64 * 2 ** 20 else 1024
    ffn_chunk = ffn
    if ffn > max_chunk:
        for nch in range(2, ffn // 128 + 1):
            if ffn % nch == 0:
                ch = ffn // nch
                if ch <= max_chunk and ch % 128 == 0:
                    ffn_chunk = ch
                    break
    n_ffn_chunks = ffn // ffn_chunk

    # ---- VMEM accounting (approximate, with slack).
    fixed = (16 * C * C * isz          # w1 + w2 resident, double-buffered
             + 8 * C * gw * isz        # per-group qkv/proj stacks, double-buffered
             + 32 * C * 4)             # biases / LN params (generous)
    per_row = (4 * C * 4               # x-in + out blocks, double-buffered, f32
               + C * 4 + C * isz + gw * isz     # acc / xc / z scratches
               + 4 * (5 * gw + 3 * C)           # live qkv/q/k/v/x1/y f32 intermediates
               + 4 * 2 * ffn_chunk              # h1 chunk + partial sum
               + 4 * 2 * T)                     # attention scores / probs rows
    budget_rows = max(budget - fixed, 0)

    # ---- batch block: largest divisor of B whose rows tile (8,128) and fit the budget;
    # on multi-core parts (v7x / megacore) prefer nb >= 2 so both cores get work.
    if block_b is None:
        cands = []
        for d in range(1, B + 1):
            if B % d:
                continue
            rows = d * T
            if rows % 8 != 0 and rows != B * T:
                continue
            cands.append((d, rows, B // d, rows * per_row <= budget_rows))
        pool = [c for c in cands if c[3]] or cands
        if info["multi_core"]:
            multi = [c for c in pool if c[2] >= 2]
            if multi:
                pool = multi
        block_b = max(pool, key=lambda c: c[1])[0]
    assert B % block_b == 0
    nb = B // block_b
    n_rows = block_b * T

    needed = fixed + n_rows * per_row
    vmem_limit = int(max(32 * 2 ** 20, min(int(needed * 1.4), budget)))
    if needed > budget:                      # last resort: declare what we actually need
        vmem_limit = int(needed * 1.15)

    # ---- host-side (one-time) weight re-layout: head-group-major stacks, fused QKV.
    def group_w(w):                          # (C, C) -> (NG, C, gw)
        return w.reshape(C, NG, G, hd).transpose(1, 0, 2, 3).reshape(NG, C, gw)

    def group_b(b):                          # (1, C) -> (NG, 1, gw)
        return b.reshape(1, NG, G, hd).transpose(1, 0, 2, 3).reshape(NG, 1, gw)

    wqkv = jnp.concatenate([group_w(wq), group_w(wk), group_w(wv)],
                           axis=-1).astype(compute_dtype)           # (NG, C, 3*gw)
    bqkv = jnp.concatenate([group_b(bq), group_b(bk), group_b(bv)],
                           axis=-1).astype(f32)                     # (NG, 1, 3*gw)
    wp_g = wp.reshape(NG, gw, C).astype(compute_dtype)              # (NG, gw, C)
    w1c, w2c = w1.astype(compute_dtype), w2.astype(compute_dtype)
    bp_, b1_, b2_ = bp.astype(f32), b1.astype(f32), b2.astype(f32)
    gamma_, beta_ = gamma.astype(f32), beta.astype(f32)

    x_flat = x.reshape(B * T, C)

    const2 = lambda shape: pl.BlockSpec(shape, lambda b, g: (0, 0))
    group3 = lambda shape: pl.BlockSpec(shape, lambda b, g: (g, 0, 0))

    in_specs = [
        pl.BlockSpec((n_rows, C), lambda b, g: (b, 0)),   # x rows of this batch block
        group3((1, C, 3 * gw)), group3((1, 1, 3 * gw)),   # fused qkv weights / biases
        group3((1, gw, C)), const2((1, C)),               # projection rows, bp
        const2((1, C)), const2((1, C)),                   # gamma, beta (resident)
        const2((C, 4 * C)), const2((1, 4 * C)),           # w1, b1      (resident)
        const2((4 * C, C)), const2((1, C)),               # w2, b2      (resident)
    ]
    out_spec = pl.BlockSpec((n_rows, C), lambda b, g: (b, 0))

    kernel = functools.partial(
        _encoder_block_kernel,
        heads_per_group=G, head_dim=hd, block_b=block_b, seq_len=T, emb=C,
        compute_dtype=compute_dtype, ffn_chunk=ffn_chunk, n_ffn_chunks=n_ffn_chunks,
        approx_recip=bool(jnp.dtype(compute_dtype) != jnp.dtype(jnp.float32)),
    )
    out_flat = pl.pallas_call(
        kernel,
        out_shape=jax.ShapeDtypeStruct((B * T, C), x.dtype),
        grid_spec=pltpu.PrefetchScalarGridSpec(
            num_scalar_prefetch=0,
            grid=(nb, NG),                                 # head-group axis last = accumulation
            in_specs=in_specs,
            out_specs=out_spec,
            scratch_shapes=[
                pltpu.VMEM((n_rows, C), jnp.float32),      # attention-out accumulator
                pltpu.VMEM((n_rows, C), compute_dtype),    # hoisted cast of x
                pltpu.VMEM((n_rows, gw), compute_dtype),   # per-group concatenated heads
            ],
        ),
        compiler_params=pltpu.CompilerParams(
            dimension_semantics=("parallel", "arbitrary"),
            vmem_limit_bytes=vmem_limit,
        ),
    )(x_flat, wqkv, bqkv, wp_g, bp_, gamma_, beta_, w1c, b1_, w2c, b2_)
    return out_flat.reshape(B, T, C)


def encoder_block_ref(x, params, n_heads, matmul_dtype=jnp.float32):
    """Pure-JAX reference mirroring the PyTorch forward (eval mode).  With
    matmul_dtype=bfloat16 it mirrors the kernel's mixed-precision matmuls."""
    (wq, bq, wk, bk, wv, bv, wp, bp, gamma, beta, w1, b1, w2, b2) = params
    B, T, C = x.shape
    hd = C // n_heads
    d = matmul_dtype
    f32 = jnp.float32

    def lin(a, w, b):
        return jnp.dot(a.astype(d), w.astype(d), preferred_element_type=f32) + b

    q = lin(x, wq, bq) * (1.0 / math.sqrt(C))
    k = lin(x, wk, bk)
    v = lin(x, wv, bv)

    def heads(y):                     # (B,T,C) -> (B,H,T,hd)
        return y.reshape(B, T, n_heads, hd).transpose(0, 2, 1, 3)

    qh, kh, vh = heads(q), heads(k), heads(v)
    s = jnp.einsum("bhqd,bhkd->bhqk", qh.astype(d), kh.astype(d),
                   preferred_element_type=f32)
    p = jax.nn.softmax(s, axis=-1)
    z = jnp.einsum("bhqk,bhkd->bhqd", p.astype(d), vh.astype(d),
                   preferred_element_type=f32)
    z = z.transpose(0, 2, 1, 3).reshape(B, T, C)
    attn = lin(z, wp, bp)

    def ln(y):
        mu = jnp.mean(y, axis=-1, keepdims=True)
        var = jnp.mean((y - mu) ** 2, axis=-1, keepdims=True)
        return (y - mu) / jnp.sqrt(var + 1e-5) * gamma + beta

    x1 = x + ln(attn)
    h1 = lin(x1, w1, b1)
    h1 = 0.5 * h1 * (1.0 + jax.lax.erf(h1 * (1.0 / math.sqrt(2.0))))
    y = lin(h1, w2, b2)
    return x1 + ln(y)


def make_params(key, C):
    ks = jax.random.split(key, 12)
    wstd = C ** -0.5
    bstd = 0.02
    wq = wstd * jax.random.normal(ks[0], (C, C), jnp.float32)
    wk = wstd * jax.random.normal(ks[1], (C, C), jnp.float32)
    wv = wstd * jax.random.normal(ks[2], (C, C), jnp.float32)
    wp = wstd * jax.random.normal(ks[3], (C, C), jnp.float32)
    bq = bstd * jax.random.normal(ks[4], (1, C), jnp.float32)
    bk = bstd * jax.random.normal(ks[5], (1, C), jnp.float32)
    bv = bstd * jax.random.normal(ks[6], (1, C), jnp.float32)
    bp = bstd * jax.random.normal(ks[7], (1, C), jnp.float32)
    gamma = 1.0 + 0.1 * jax.random.normal(ks[8], (1, C), jnp.float32)
    beta = 0.1 * jax.random.normal(ks[9], (1, C), jnp.float32)
    w1 = wstd * jax.random.normal(ks[10], (C, 4 * C), jnp.float32)
    b1 = bstd * jnp.ones((1, 4 * C), jnp.float32)
    w2 = (4 * C) ** -0.5 * jax.random.normal(ks[11], (4 * C, C), jnp.float32)
    b2 = bstd * jnp.ones((1, C), jnp.float32)
    return (wq, bq, wk, bk, wv, bv, wp, bp, gamma, beta, w1, b1, w2, b2)


if __name__ == "__main__":
    B, T, C, H = 2, 8, 32, 4          # batch, seq (== max_len), n_embeddings, n_heads
    key = jax.random.PRNGKey(0)
    kx, kp = jax.random.split(key)
    x = jax.random.normal(kx, (B, T, C), jnp.float32)
    params = make_params(kp, C)

    # 1) f32 compute path: tight structural check against the pure-JAX reference.
    out_f32 = jax.block_until_ready(
        encoder_block_pallas(x, params, H, compute_dtype=jnp.float32))
    ref_f32 = encoder_block_ref(x, params, H)
    assert out_f32.shape == (B, T, C)
    assert jnp.allclose(out_f32, ref_f32, atol=1e-4, rtol=1e-4), "f32 kernel mismatch"

    # 2) default bf16 fast path (bf16 matmuls, f32 accumulation / softmax / LayerNorm),
    #    checked against a reference that mirrors the same mixed-precision matmuls.
    out_bf16 = jax.block_until_ready(encoder_block_pallas(x, params, H))
    ref_bf16 = encoder_block_ref(x, params, H, matmul_dtype=jnp.bfloat16)
    assert out_bf16.shape == (B, T, C)
    assert jnp.allclose(out_bf16, ref_bf16, atol=5e-2, rtol=5e-2), "bf16 kernel mismatch"

    print("KERNEL_OK")
</pallas_src>

<mosaic_0001>
module attributes {stable_mosaic.version = 11 : i64} {
  func.func @_encoder_block_kernel(%arg0: i32, %arg1: i32, %arg2: memref<16x32xf32, #tpu.memory_space<vmem>>, %arg3: memref<1x32x96xf32, #tpu.memory_space<vmem>>, %arg4: memref<1x1x96xf32, #tpu.memory_space<vmem>>, %arg5: memref<1x32x32xf32, #tpu.memory_space<vmem>>, %arg6: memref<1x32xf32, #tpu.memory_space<vmem>>, %arg7: memref<1x32xf32, #tpu.memory_space<vmem>>, %arg8: memref<1x32xf32, #tpu.memory_space<vmem>>, %arg9: memref<32x128xf32, #tpu.memory_space<vmem>>, %arg10: memref<1x128xf32, #tpu.memory_space<vmem>>, %arg11: memref<128x32xf32, #tpu.memory_space<vmem>>, %arg12: memref<1x32xf32, #tpu.memory_space<vmem>>, %arg13: memref<16x32xf32, #tpu.memory_space<vmem>>, %arg14: memref<16x32xf32, #tpu.memory_space<vmem>>, %arg15: memref<16x32xf32, #tpu.memory_space<vmem>>, %arg16: memref<16x32xf32, #tpu.memory_space<vmem>>) attributes {dimension_semantics = [#tpu.dimension_semantics<parallel>, #tpu.dimension_semantics<arbitrary>], iteration_bounds = array<i64: 1, 1>, scalar_prefetch = 0 : i64, scratch_operands = 3 : i64, tpu.core_type = #tpu.core_type<tc>, window_params = [{transform_indices = @transform_0, window_bounds = array<i64: 16, 32>}, {transform_indices = @transform_1, window_bounds = array<i64: 1, 32, 96>}, {transform_indices = @transform_2, window_bounds = array<i64: 1, 1, 96>}, {transform_indices = @transform_3, window_bounds = array<i64: 1, 32, 32>}, {pipeline_mode = #tpu.pipeline_mode<synchronous>, transform_indices = @transform_4, window_bounds = array<i64: 1, 32>}, {pipeline_mode = #tpu.pipeline_mode<synchronous>, transform_indices = @transform_5, window_bounds = array<i64: 1, 32>}, {pipeline_mode = #tpu.pipeline_mode<synchronous>, transform_indices = @transform_6, window_bounds = array<i64: 1, 32>}, {pipeline_mode = #tpu.pipeline_mode<synchronous>, transform_indices = @transform_7, window_bounds = array<i64: 32, 128>}, {pipeline_mode = #tpu.pipeline_mode<synchronous>, transform_indices = @transform_8, window_bounds = array<i64: 1, 128>}, {pipeline_mode = #tpu.pipeline_mode<synchronous>, transform_indices = @transform_9, window_bounds = array<i64: 128, 32>}, {pipeline_mode = #tpu.pipeline_mode<synchronous>, transform_indices = @transform_10, window_bounds = array<i64: 1, 32>}, {transform_indices = @transform_11, window_bounds = array<i64: 16, 32>}]} {
    %c0_i32 = arith.constant 0 : i32
    %0 = arith.cmpi eq, %arg1, %c0_i32 : i32
    %1 = arith.extui %0 : i1 to i32
    %c0_i32_0 = arith.constant 0 : i32
    %2 = arith.cmpi ne, %1, %c0_i32_0 : i32
    scf.if %2 {
      %c0_42 = arith.constant 0 : index
      %c0_43 = arith.constant 0 : index
      %106 = vector.load %arg2[%c0_42, %c0_43] : memref<16x32xf32, #tpu.memory_space<vmem>>, vector<16x32xf32>
      %c0_44 = arith.constant 0 : index
      %c0_45 = arith.constant 0 : index
      %107 = vector.load %arg15[%c0_44, %c0_45] : memref<16x32xf32, #tpu.memory_space<vmem>>, vector<16x32xf32>
      tpu.vector_store %arg15[%c0_44, %c0_45], %106 {strides = array<i32>} : memref<16x32xf32, #tpu.memory_space<vmem>>, vector<16x32xf32>,
      %c0_46 = arith.constant 0 : index
      %c0_47 = arith.constant 0 : index
      %108 = vector.load %arg6[%c0_46, %c0_47] : memref<1x32xf32, #tpu.memory_space<vmem>>, vector<1x32xf32>
      %109 = vector.shape_cast %108 : vector<1x32xf32> to vector<1x32xf32>
      %110 = vector.broadcast %109 : vector<1x32xf32> to vector<16x32xf32>
      %c0_48 = arith.constant 0 : index
      %c0_49 = arith.constant 0 : index
      %111 = vector.load %arg14[%c0_48, %c0_49] : memref<16x32xf32, #tpu.memory_space<vmem>>, vector<16x32xf32>
      tpu.vector_store %arg14[%c0_48, %c0_49], %110 {strides = array<i32>} : memref<16x32xf32, #tpu.memory_space<vmem>>, vector<16x32xf32>,
    } else {
    }
    %c0 = arith.constant 0 : index
    %c0_1 = arith.constant 0 : index
    %3 = vector.load %arg15[%c0, %c0_1] : memref<16x32xf32, #tpu.memory_space<vmem>>, vector<16x32xf32>
    %c0_2 = arith.constant 0 : index
    %c0_3 = arith.constant 0 : index
    %c0_4 = arith.constant 0 : index
    %4 = vector.load %arg3[%c0_2, %c0_3, %c0_4] : memref<1x32x96xf32, #tpu.memory_space<vmem>>, vector<1x32x96xf32>
    %5 = vector.shape_cast %4 : vector<1x32x96xf32> to vector<32x96xf32>
    %cst = arith.constant dense<0.000000e+00> : vector<16x96xf32>
    %6 = tpu.matmul %3, %5, %cst {dimension_numbers = #tpu.dot_dimension_numbers<[1], [0], [0], [1], [0, 0, 1, 1], [], []>} : vector<16x32xf32>, vector<32x96xf32>, vector<16x96xf32> -> vector<16x96xf32>
    %c0_5 = arith.constant 0 : index
    %c0_6 = arith.constant 0 : index
    %c0_7 = arith.constant 0 : index
    %7 = vector.load %arg4[%c0_5, %c0_6, %c0_7] : memref<1x1x96xf32, #tpu.memory_space<vmem>>, vector<1x1x96xf32>
    %8 = vector.shape_cast %7 : vector<1x1x96xf32> to vector<1x96xf32>
    %9 = vector.broadcast %8 : vector<1x96xf32> to vector<16x96xf32>
    %10 = arith.addf %6, %9 : vector<16x96xf32>
    %11 = vector.extract_strided_slice %10 {offsets = [0, 0], sizes = [16, 32], strides = [1, 1]} : vector<16x96xf32> to vector<16x32xf32>
    %cst_8 = arith.constant 0.176776692 : f32
    %12 = vector.broadcast %cst_8 : f32 to vector<16x32xf32>
    %13 = arith.mulf %11, %12 : vector<16x32xf32>
    %14 = vector.extract_strided_slice %10 {offsets = [0, 32], sizes = [16, 32], strides = [1, 1]} : vector<16x96xf32> to vector<16x32xf32>
    %15 = vector.extract_strided_slice %10 {offsets = [0, 64], sizes = [16, 32], strides = [1, 1]} : vector<16x96xf32> to vector<16x32xf32>
    %16 = vector.extract_strided_slice %13 {offsets = [0, 0], sizes = [16, 8], strides = [1, 1]} : vector<16x32xf32> to vector<16x8xf32>
    %17 = vector.shape_cast %16 : vector<16x8xf32> to vector<2x8x8xf32>
    %18 = vector.extract_strided_slice %14 {offsets = [0, 0], sizes = [16, 8], strides = [1, 1]} : vector<16x32xf32> to vector<16x8xf32>
    %19 = vector.shape_cast %18 : vector<16x8xf32> to vector<2x8x8xf32>
    %20 = vector.extract_strided_slice %15 {offsets = [0, 0], sizes = [16, 8], strides = [1, 1]} : vector<16x32xf32> to vector<16x8xf32>
    %21 = vector.shape_cast %20 : vector<16x8xf32> to vector<2x8x8xf32>
    "tpu.trace_start"() <{level = 10 : i32, message = "bqd,bkd->bqk"}> : () -> ()
    %cst_9 = arith.constant dense<0.000000e+00> : vector<2x8x8xf32>
    %22 = tpu.matmul %17, %19, %cst_9 {dimension_numbers = #tpu.dot_dimension_numbers<[2], [2], [1], [1], [0, 0, 0, 1, 1, 1], [0], [0]>} : vector<2x8x8xf32>, vector<2x8x8xf32>, vector<2x8x8xf32> -> vector<2x8x8xf32>
    "tpu.trace_stop"() : () -> ()
    %cst_10 = arith.constant dense<0xFF800000> : vector<2x8xf32>
    %23 = vector.multi_reduction <maximumf>, %22, %cst_10 [2] : vector<2x8x8xf32> to vector<2x8xf32>
    %24 = vector.shape_cast %23 : vector<2x8xf32> to vector<2x8x1xf32>
    %25 = vector.broadcast %24 : vector<2x8x1xf32> to vector<2x8x8xf32>
    %26 = arith.subf %22, %25 : vector<2x8x8xf32>
    %27 = math.exp %26 : vector<2x8x8xf32>
    %cst_11 = arith.constant dense<0.000000e+00> : vector<2x8xf32>
    %28 = vector.multi_reduction <add>, %27, %cst_11 [2] : vector<2x8x8xf32> to vector<2x8xf32>
    %29 = vector.shape_cast %28 : vector<2x8xf32> to vector<2x8x1xf32>
    %30 = tpu.reciprocal %29 : vector<2x8x1xf32> -> vector<2x8x1xf32>
    %31 = vector.broadcast %30 : vector<2x8x1xf32> to vector<2x8x8xf32>
    %32 = arith.mulf %27, %31 : vector<2x8x8xf32>
    "tpu.trace_start"() <{level = 10 : i32, message = "bqk,bkd->bqd"}> : () -> ()
    %cst_12 = arith.constant dense<0.000000e+00> : vector<2x8x8xf32>
    %33 = tpu.matmul %32, %21, %cst_12 {dimension_numbers = #tpu.dot_dimension_numbers<[2], [1], [1], [2], [0, 0, 0, 1, 1, 2], [0], [0]>} : vector<2x8x8xf32>, vector<2x8x8xf32>, vector<2x8x8xf32> -> vector<2x8x8xf32>
    "tpu.trace_stop"() : () -> ()
    %34 = vector.shape_cast %33 : vector<2x8x8xf32> to vector<16x8xf32>
    %c0_13 = arith.constant 0 : index
    %c0_14 = arith.constant 0 : index
    %35 = vector.load %arg16[%c0_13, %c0_14] : memref<16x32xf32, #tpu.memory_space<vmem>>, vector<16x8xf32>
    tpu.vector_store %arg16[%c0_13, %c0_14], %34 {strides = array<i32>} : memref<16x32xf32, #tpu.memory_space<vmem>>, vector<16x8xf32>,
    %36 = vector.extract_strided_slice %13 {offsets = [0, 8], sizes = [16, 8], strides = [1, 1]} : vector<16x32xf32> to vector<16x8xf32>
    %37 = vector.shape_cast %36 : vector<16x8xf32> to vector<2x8x8xf32>
    %38 = vector.extract_strided_slice %14 {offsets = [0, 8], sizes = [16, 8], strides = [1, 1]} : vector<16x32xf32> to vector<16x8xf32>
    %39 = vector.shape_cast %38 : vector<16x8xf32> to vector<2x8x8xf32>
    %40 = vector.extract_strided_slice %15 {offsets = [0, 8], sizes = [16, 8], strides = [1, 1]} : vector<16x32xf32> to vector<16x8xf32>
    %41 = vector.shape_cast %40 : vector<16x8xf32> to vector<2x8x8xf32>
    "tpu.trace_start"() <{level = 10 : i32, message = "bqd,bkd->bqk"}> : () -> ()
    %cst_15 = arith.constant dense<0.000000e+00> : vector<2x8x8xf32>
    %42 = tpu.matmul %37, %39, %cst_15 {dimension_numbers = #tpu.dot_dimension_numbers<[2], [2], [1], [1], [0, 0, 0, 1, 1, 1], [0], [0]>} : vector<2x8x8xf32>, vector<2x8x8xf32>, vector<2x8x8xf32> -> vector<2x8x8xf32>
    "tpu.trace_stop"() : () -> ()
    %cst_16 = arith.constant dense<0xFF800000> : vector<2x8xf32>
    %43 = vector.multi_reduction <maximumf>, %42, %cst_16 [2] : vector<2x8x8xf32> to vector<2x8xf32>
    %44 = vector.shape_cast %43 : vector<2x8xf32> to vector<2x8x1xf32>
    %45 = vector.broadcast %44 : vector<2x8x1xf32> to vector<2x8x8xf32>
    %46 = arith.subf %42, %45 : vector<2x8x8xf32>
    %47 = math.exp %46 : vector<2x8x8xf32>
    %cst_17 = arith.constant dense<0.000000e+00> : vector<2x8xf32>
    %48 = vector.multi_reduction <add>, %47, %cst_17 [2] : vector<2x8x8xf32> to vector<2x8xf32>
    %49 = vector.shape_cast %48 : vector<2x8xf32> to vector<2x8x1xf32>
    %50 = tpu.reciprocal %49 : vector<2x8x1xf32> -> vector<2x8x1xf32>
    %51 = vector.broadcast %50 : vector<2x8x1xf32> to vector<2x8x8xf32>
    %52 = arith.mulf %47, %51 : vector<2x8x8xf32>
    "tpu.trace_start"() <{level = 10 : i32, message = "bqk,bkd->bqd"}> : () -> ()
    %cst_18 = arith.constant dense<0.000000e+00> : vector<2x8x8xf32>
    %53 = tpu.matmul %52, %41, %cst_18 {dimension_numbers = #tpu.dot_dimension_numbers<[2], [1], [1], [2], [0, 0, 0, 1, 1, 2], [0], [0]>} : vector<2x8x8xf32>, vector<2x8x8xf32>, vector<2x8x8xf32> -> vector<2x8x8xf32>
    "tpu.trace_stop"() : () -> ()
    %54 = vector.shape_cast %53 : vector<2x8x8xf32> to vector<16x8xf32>
    %c0_19 = arith.constant 0 : index
    %c8 = arith.constant 8 : index
    %55 = vector.load %arg16[%c0_19, %c8] : memref<16x32xf32, #tpu.memory_space<vmem>>, vector<16x8xf32>
    tpu.vector_store %arg16[%c0_19, %c8], %54 {strides = array<i32>} : memref<16x32xf32, #tpu.memory_space<vmem>>, vector<16x8xf32>,
    %56 = vector.extract_strided_slice %13 {offsets = [0, 16], sizes = [16, 8], strides = [1, 1]} : vector<16x32xf32> to vector<16x8xf32>
    %57 = vector.shape_cast %56 : vector<16x8xf32> to vector<2x8x8xf32>
    %58 = vector.extract_strided_slice %14 {offsets = [0, 16], sizes = [16, 8], strides = [1, 1]} : vector<16x32xf32> to vector<16x8xf32>
    %59 = vector.shape_cast %58 : vector<16x8xf32> to vector<2x8x8xf32>
    %60 = vector.extract_strided_slice %15 {offsets = [0, 16], sizes = [16, 8], strides = [1, 1]} : vector<16x32xf32> to vector<16x8xf32>
    %61 = vector.shape_cast %60 : vector<16x8xf32> to vector<2x8x8xf32>
    "tpu.trace_start"() <{level = 10 : i32, message = "bqd,bkd->bqk"}> : () -> ()
    %cst_20 = arith.constant dense<0.000000e+00> : vector<2x8x8xf32>
    %62 = tpu.matmul %57, %59, %cst_20 {dimension_numbers = #tpu.dot_dimension_numbers<[2], [2], [1], [1], [0, 0, 0, 1, 1, 1], [0], [0]>} : vector<2x8x8xf32>, vector<2x8x8xf32>, vector<2x8x8xf32> -> vector<2x8x8xf32>
    "tpu.trace_stop"() : () -> ()
    %cst_21 = arith.constant dense<0xFF800000> : vector<2x8xf32>
    %63 = vector.multi_reduction <maximumf>, %62, %cst_21 [2] : vector<2x8x8xf32> to vector<2x8xf32>
    %64 = vector.shape_cast %63 : vector<2x8xf32> to vector<2x8x1xf32>
    %65 = vector.broadcast %64 : vector<2x8x1xf32> to vector<2x8x8xf32>
    %66 = arith.subf %62, %65 : vector<2x8x8xf32>
    %67 = math.exp %66 : vector<2x8x8xf32>
    %cst_22 = arith.constant dense<0.000000e+00> : vector<2x8xf32>
    %68 = vector.multi_reduction <add>, %67, %cst_22 [2] : vector<2x8x8xf32> to vector<2x8xf32>
    %69 = vector.shape_cast %68 : vector<2x8xf32> to vector<2x8x1xf32>
    %70 = tpu.reciprocal %69 : vector<2x8x1xf32> -> vector<2x8x1xf32>
    %71 = vector.broadcast %70 : vector<2x8x1xf32> to vector<2x8x8xf32>
    %72 = arith.mulf %67, %71 : vector<2x8x8xf32>
    "tpu.trace_start"() <{level = 10 : i32, message = "bqk,bkd->bqd"}> : () -> ()
    %cst_23 = arith.constant dense<0.000000e+00> : vector<2x8x8xf32>
    %73 = tpu.matmul %72, %61, %cst_23 {dimension_numbers = #tpu.dot_dimension_numbers<[2], [1], [1], [2], [0, 0, 0, 1, 1, 2], [0], [0]>} : vector<2x8x8xf32>, vector<2x8x8xf32>, vector<2x8x8xf32> -> vector<2x8x8xf32>
    "tpu.trace_stop"() : () -> ()
    %74 = vector.shape_cast %73 : vector<2x8x8xf32> to vector<16x8xf32>
    %c0_24 = arith.constant 0 : index
    %c16 = arith.constant 16 : index
    %75 = vector.load %arg16[%c0_24, %c16] : memref<16x32xf32, #tpu.memory_space<vmem>>, vector<16x8xf32>
    tpu.vector_store %arg16[%c0_24, %c16], %74 {strides = array<i32>} : memref<16x32xf32, #tpu.memory_space<vmem>>, vector<16x8xf32>,
    %76 = vector.extract_strided_slice %13 {offsets = [0, 24], sizes = [16, 8], strides = [1, 1]} : vector<16x32xf32> to vector<16x8xf32>
    %77 = vector.shape_cast %76 : vector<16x8xf32> to vector<2x8x8xf32>
    %78 = vector.extract_strided_slice %14 {offsets = [0, 24], sizes = [16, 8], strides = [1, 1]} : vector<16x32xf32> to vector<16x8xf32>
    %79 = vector.shape_cast %78 : vector<16x8xf32> to vector<2x8x8xf32>
    %80 = vector.extract_strided_slice %15 {offsets = [0, 24], sizes = [16, 8], strides = [1, 1]} : vector<16x32xf32> to vector<16x8xf32>
    %81 = vector.shape_cast %80 : vector<16x8xf32> to vector<2x8x8xf32>
    "tpu.trace_start"() <{level = 10 : i32, message = "bqd,bkd->bqk"}> : () -> ()
    %cst_25 = arith.constant dense<0.000000e+00> : vector<2x8x8xf32>
    %82 = tpu.matmul %77, %79, %cst_25 {dimension_numbers = #tpu.dot_dimension_numbers<[2], [2], [1], [1], [0, 0, 0, 1, 1, 1], [0], [0]>} : vector<2x8x8xf32>, vector<2x8x8xf32>, vector<2x8x8xf32> -> vector<2x8x8xf32>
    "tpu.trace_stop"() : () -> ()
    %cst_26 = arith.constant dense<0xFF800000> : vector<2x8xf32>
    %83 = vector.multi_reduction <maximumf>, %82, %cst_26 [2] : vector<2x8x8xf32> to vector<2x8xf32>
    %84 = vector.shape_cast %83 : vector<2x8xf32> to vector<2x8x1xf32>
    %85 = vector.broadcast %84 : vector<2x8x1xf32> to vector<2x8x8xf32>
    %86 = arith.subf %82, %85 : vector<2x8x8xf32>
    %87 = math.exp %86 : vector<2x8x8xf32>
    %cst_27 = arith.constant dense<0.000000e+00> : vector<2x8xf32>
    %88 = vector.multi_reduction <add>, %87, %cst_27 [2] : vector<2x8x8xf32> to vector<2x8xf32>
    %89 = vector.shape_cast %88 : vector<2x8xf32> to vector<2x8x1xf32>
    %90 = tpu.reciprocal %89 : vector<2x8x1xf32> -> vector<2x8x1xf32>
    %91 = vector.broadcast %90 : vector<2x8x1xf32> to vector<2x8x8xf32>
    %92 = arith.mulf %87, %91 : vector<2x8x8xf32>
    "tpu.trace_start"() <{level = 10 : i32, message = "bqk,bkd->bqd"}> : () -> ()
    %cst_28 = arith.constant dense<0.000000e+00> : vector<2x8x8xf32>
    %93 = tpu.matmul %92, %81, %cst_28 {dimension_numbers = #tpu.dot_dimension_numbers<[2], [1], [1], [2], [0, 0, 0, 1, 1, 2], [0], [0]>} : vector<2x8x8xf32>, vector<2x8x8xf32>, vector<2x8x8xf32> -> vector<2x8x8xf32>
    "tpu.trace_stop"() : () -> ()
    %94 = vector.shape_cast %93 : vector<2x8x8xf32> to vector<16x8xf32>
    %c0_29 = arith.constant 0 : index
    %c24 = arith.constant 24 : index
    %95 = vector.load %arg16[%c0_29, %c24] : memref<16x32xf32, #tpu.memory_space<vmem>>, vector<16x8xf32>
    tpu.vector_store %arg16[%c0_29, %c24], %94 {strides = array<i32>} : memref<16x32xf32, #tpu.memory_space<vmem>>, vector<16x8xf32>,
    %c0_30 = arith.constant 0 : index
    %c0_31 = arith.constant 0 : index
    %96 = vector.load %arg14[%c0_30, %c0_31] : memref<16x32xf32, #tpu.memory_space<vmem>>, vector<16x32xf32>
    %c0_32 = arith.constant 0 : index
    %c0_33 = arith.constant 0 : index
    %97 = vector.load %arg16[%c0_32, %c0_33] : memref<16x32xf32, #tpu.memory_space<vmem>>, vector<16x32xf32>
    %c0_34 = arith.constant 0 : index
    %c0_35 = arith.constant 0 : index
    %c0_36 = arith.constant 0 : index
    %98 = vector.load %arg5[%c0_34, %c0_35, %c0_36] : memref<1x32x32xf32, #tpu.memory_space<vmem>>, vector<1x32x32xf32>
    %99 = vector.shape_cast %98 : vector<1x32x32xf32> to vector<32x32xf32>
    %cst_37 = arith.constant dense<0.000000e+00> : vector<16x32xf32>
    %100 = tpu.matmul %97, %99, %cst_37 {dimension_numbers = #tpu.dot_dimension_numbers<[1], [0], [0], [1], [0, 0, 1, 1], [], []>} : vector<16x32xf32>, vector<32x32xf32>, vector<16x32xf32> -> vector<16x32xf32>
    %101 = arith.addf %96, %100 : vector<16x32xf32>
    %c0_38 = arith.constant 0 : index
    %c0_39 = arith.constant 0 : index
    %102 = vector.load %arg14[%c0_38, %c0_39] : memref<16x32xf32, #tpu.memory_space<vmem>>, vector<16x32xf32>
    tpu.vector_store %arg14[%c0_38, %c0_39], %101 {strides = array<i32>} : memref<16x32xf32, #tpu.memory_space<vmem>>, vector<16x32xf32>,
    %c0_i32_40 = arith.constant 0 : i32
    %103 = arith.cmpi eq, %arg1, %c0_i32_40 : i32
    %104 = arith.extui %103 : i1 to i32
    %c0_i32_41 = arith.constant 0 : i32
    %105 = arith.cmpi ne, %104, %c0_i32_41 : i32
    scf.if %105 {
      %c0_42 = arith.constant 0 : index
      %c0_43 = arith.constant 0 : index
      %106 = vector.load %arg7[%c0_42, %c0_43] : memref<1x32xf32, #tpu.memory_space<vmem>>, vector<1x32xf32>
      %c0_44 = arith.constant 0 : index
      %c0_45 = arith.constant 0 : index
      %107 = vector.load %arg8[%c0_44, %c0_45] : memref<1x32xf32, #tpu.memory_space<vmem>>, vector<1x32xf32>
      %c0_46 = arith.constant 0 : index
      %c0_47 = arith.constant 0 : index
      %108 = vector.load %arg2[%c0_46, %c0_47] : memref<16x32xf32, #tpu.memory_space<vmem>>, vector<16x32xf32>
      %c0_48 = arith.constant 0 : index
      %c0_49 = arith.constant 0 : index
      %109 = vector.load %arg14[%c0_48, %c0_49] : memref<16x32xf32, #tpu.memory_space<vmem>>, vector<16x32xf32>
      %cst_50 = arith.constant dense<0.000000e+00> : vector<16xf32>
      %110 = vector.multi_reduction <add>, %109, %cst_50 [1] : vector<16x32xf32> to vector<16xf32>
      %111 = vector.shape_cast %110 : vector<16xf32> to vector<16x1xf32>
      %cst_51 = arith.constant 3.200000e+01 : f32
      %112 = vector.broadcast %cst_51 : f32 to vector<16x1xf32>
      %113 = arith.divf %111, %112 : vector<16x1xf32>
      %114 = vector.broadcast %113 : vector<16x1xf32> to vector<16x32xf32>
      %115 = arith.subf %109, %114 : vector<16x32xf32>
      %116 = arith.mulf %115, %115 : vector<16x32xf32>
      %cst_52 = arith.constant dense<0.000000e+00> : vector<16xf32>
      %117 = vector.multi_reduction <add>, %116, %cst_52 [1] : vector<16x32xf32> to vector<16xf32>
      %118 = vector.shape_cast %117 : vector<16xf32> to vector<16x1xf32>
      %cst_53 = arith.constant 3.200000e+01 : f32
      %119 = vector.broadcast %cst_53 : f32 to vector<16x1xf32>
      %120 = arith.divf %118, %119 : vector<16x1xf32>
      %121 = vector.broadcast %113 : vector<16x1xf32> to vector<16x32xf32>
      %122 = arith.subf %109, %121 : vector<16x32xf32>
      %cst_54 = arith.constant 9.99999974E-6 : f32
      %123 = vector.broadcast %cst_54 : f32 to vector<16x1xf32>
      %124 = arith.addf %120, %123 : vector<16x1xf32>
      %125 = math.rsqrt %124 : vector<16x1xf32>
      %126 = vector.broadcast %125 : vector<16x1xf32> to vector<16x32xf32>
      %127 = arith.mulf %122, %126 : vector<16x32xf32>
      %128 = vector.broadcast %106 : vector<1x32xf32> to vector<16x32xf32>
      %129 = arith.mulf %127, %128 : vector<16x32xf32>
      %130 = vector.broadcast %107 : vector<1x32xf32> to vector<16x32xf32>
      %131 = arith.addf %129, %130 : vector<16x32xf32>
      %132 = arith.addf %108, %131 : vector<16x32xf32>
      %c0_55 = arith.constant 0 : index
      %c0_56 = arith.constant 0 : index
      %133 = vector.load %arg12[%c0_55, %c0_56] : memref<1x32xf32, #tpu.memory_space<vmem>>, vector<1x32xf32>
      %134 = vector.shape_cast %133 : vector<1x32xf32> to vector<1x32xf32>
      %135 = vector.broadcast %134 : vector<1x32xf32> to vector<16x32xf32>
      %c0_57 = arith.constant 0 : index
      %c0_58 = arith.constant 0 : index
      %136 = vector.load %arg9[%c0_57, %c0_58] : memref<32x128xf32, #tpu.memory_space<vmem>>, vector<32x128xf32>
      %cst_59 = arith.constant dense<0.000000e+00> : vector<16x128xf32>
      %137 = tpu.matmul %132, %136, %cst_59 {dimension_numbers = #tpu.dot_dimension_numbers<[1], [0], [0], [1], [0, 0, 1, 1], [], []>} : vector<16x32xf32>, vector<32x128xf32>, vector<16x128xf32> -> vector<16x128xf32>
      %c0_60 = arith.constant 0 : index
      %c0_61 = arith.constant 0 : index
      %138 = vector.load %arg10[%c0_60, %c0_61] : memref<1x128xf32, #tpu.memory_space<vmem>>, vector<1x128xf32>
      %139 = vector.broadcast %138 : vector<1x128xf32> to vector<16x128xf32>
      %140 = arith.addf %137, %139 : vector<16x128xf32>
      %cst_62 = arith.constant 5.000000e-01 : f32
      %141 = vector.broadcast %cst_62 : f32 to vector<16x128xf32>
      %142 = arith.mulf %141, %140 : vector<16x128xf32>
      %cst_63 = arith.constant 0.707106769 : f32
      %143 = vector.broadcast %cst_63 : f32 to vector<16x128xf32>
      %144 = arith.mulf %140, %143 : vector<16x128xf32>
      %145 = math.erf %144 : vector<16x128xf32>
      %cst_64 = arith.constant 1.000000e+00 : f32
      %146 = vector.broadcast %cst_64 : f32 to vector<16x128xf32>
      %147 = arith.addf %146, %145 : vector<16x128xf32>
      %148 = arith.mulf %142, %147 : vector<16x128xf32>
      %c0_65 = arith.constant 0 : index
      %c0_66 = arith.constant 0 : index
      %149 = vector.load %arg11[%c0_65, %c0_66] : memref<128x32xf32, #tpu.memory_space<vmem>>, vector<128x32xf32>
      %cst_67 = arith.constant dense<0.000000e+00> : vector<16x32xf32>
      %150 = tpu.matmul %148, %149, %cst_67 {dimension_numbers = #tpu.dot_dimension_numbers<[1], [0], [0], [1], [0, 0, 1, 1], [], []>} : vector<16x128xf32>, vector<128x32xf32>, vector<16x32xf32> -> vector<16x32xf32>
      %151 = arith.addf %135, %150 : vector<16x32xf32>
      %cst_68 = arith.constant dense<0.000000e+00> : vector<16xf32>
      %152 = vector.multi_reduction <add>, %151, %cst_68 [1] : vector<16x32xf32> to vector<16xf32>
      %153 = vector.shape_cast %152 : vector<16xf32> to vector<16x1xf32>
      %cst_69 = arith.constant 3.200000e+01 : f32
      %154 = vector.broadcast %cst_69 : f32 to vector<16x1xf32>
      %155 = arith.divf %153, %154 : vector<16x1xf32>
      %156 = vector.broadcast %155 : vector<16x1xf32> to vector<16x32xf32>
      %157 = arith.subf %151, %156 : vector<16x32xf32>
      %158 = arith.mulf %157, %157 : vector<16x32xf32>
      %cst_70 = arith.constant dense<0.000000e+00> : vector<16xf32>
      %159 = vector.multi_reduction <add>, %158, %cst_70 [1] : vector<16x32xf32> to vector<16xf32>
      %160 = vector.shape_cast %159 : vector<16xf32> to vector<16x1xf32>
      %cst_71 = arith.constant 3.200000e+01 : f32
      %161 = vector.broadcast %cst_71 : f32 to vector<16x1xf32>
      %162 = arith.divf %160, %161 : vector<16x1xf32>
      %163 = vector.broadcast %155 : vector<16x1xf32> to vector<16x32xf32>
      %164 = arith.subf %151, %163 : vector<16x32xf32>
      %cst_72 = arith.constant 9.99999974E-6 : f32
      %165 = vector.broadcast %cst_72 : f32 to vector<16x1xf32>
      %166 = arith.addf %162, %165 : vector<16x1xf32>
      %167 = math.rsqrt %166 : vector<16x1xf32>
      %168 = vector.broadcast %167 : vector<16x1xf32> to vector<16x32xf32>
      %169 = arith.mulf %164, %168 : vector<16x32xf32>
      %170 = vector.broadcast %106 : vector<1x32xf32> to vector<16x32xf32>
      %171 = arith.mulf %169, %170 : vector<16x32xf32>
      %172 = vector.broadcast %107 : vector<1x32xf32> to vector<16x32xf32>
      %173 = arith.addf %171, %172 : vector<16x32xf32>
      %174 = arith.addf %132, %173 : vector<16x32xf32>
      %c0_73 = arith.constant 0 : index
      %c0_74 = arith.constant 0 : index
      %175 = vector.load %arg13[%c0_73, %c0_74] : memref<16x32xf32, #tpu.memory_space<vmem>>, vector<16x32xf32>
      tpu.vector_store %arg13[%c0_73, %c0_74], %174 {strides = array<i32>} : memref<16x32xf32, #tpu.memory_space<vmem>>, vector<16x32xf32>,
    } else {
    }
    return
  }
  func.func @transform_0(%arg0: i32, %arg1: i32) -> (i32, i32) {
    %c0_i32 = arith.constant 0 : i32
    %c0_i32_0 = arith.constant 0 : i32
    return %arg0, %c0_i32 : i32, i32
  }
  func.func @transform_1(%arg0: i32, %arg1: i32) -> (i32, i32, i32) {
    %c0_i32 = arith.constant 0 : i32
    %c0_i32_0 = arith.constant 0 : i32
    %c0_i32_1 = arith.constant 0 : i32
    return %arg1, %c0_i32, %c0_i32_0 : i32, i32, i32
  }
  func.func @transform_2(%arg0: i32, %arg1: i32) -> (i32, i32, i32) {
    %c0_i32 = arith.constant 0 : i32
    %c0_i32_0 = arith.constant 0 : i32
    %c0_i32_1 = arith.constant 0 : i32
    return %arg1, %c0_i32, %c0_i32_0 : i32, i32, i32
  }
  func.func @transform_3(%arg0: i32, %arg1: i32) -> (i32, i32, i32) {
    %c0_i32 = arith.constant 0 : i32
    %c0_i32_0 = arith.constant 0 : i32
    %c0_i32_1 = arith.constant 0 : i32
    return %arg1, %c0_i32, %c0_i32_0 : i32, i32, i32
  }
  func.func @transform_4(%arg0: i32, %arg1: i32) -> (i32, i32) {
    %c0_i32 = arith.constant 0 : i32
    %c0_i32_0 = arith.constant 0 : i32
    %c0_i32_1 = arith.constant 0 : i32
    return %c0_i32, %c0_i32_0 : i32, i32
  }
  func.func @transform_5(%arg0: i32, %arg1: i32) -> (i32, i32) {
    %c0_i32 = arith.constant 0 : i32
    %c0_i32_0 = arith.constant 0 : i32
    %c0_i32_1 = arith.constant 0 : i32
    return %c0_i32, %c0_i32_0 : i32, i32
  }
  func.func @transform_6(%arg0: i32, %arg1: i32) -> (i32, i32) {
    %c0_i32 = arith.constant 0 : i32
    %c0_i32_0 = arith.constant 0 : i32
    %c0_i32_1 = arith.constant 0 : i32
    return %c0_i32, %c0_i32_0 : i32, i32
  }
  func.func @transform_7(%arg0: i32, %arg1: i32) -> (i32, i32) {
    %c0_i32 = arith.constant 0 : i32
    %c0_i32_0 = arith.constant 0 : i32
    %c0_i32_1 = arith.constant 0 : i32
    return %c0_i32, %c0_i32_0 : i32, i32
  }
  func.func @transform_8(%arg0: i32, %arg1: i32) -> (i32, i32) {
    %c0_i32 = arith.constant 0 : i32
    %c0_i32_0 = arith.constant 0 : i32
    %c0_i32_1 = arith.constant 0 : i32
    return %c0_i32, %c0_i32_0 : i32, i32
  }
  func.func @transform_9(%arg0: i32, %arg1: i32) -> (i32, i32) {
    %c0_i32 = arith.constant 0 : i32
    %c0_i32_0 = arith.constant 0 : i32
    %c0_i32_1 = arith.constant 0 : i32
    return %c0_i32, %c0_i32_0 : i32, i32
  }
  func.func @transform_10(%arg0: i32, %arg1: i32) -> (i32, i32) {
    %c0_i32 = arith.constant 0 : i32
    %c0_i32_0 = arith.constant 0 : i32
    %c0_i32_1 = arith.constant 0 : i32
    return %c0_i32, %c0_i32_0 : i32, i32
  }
  func.func @transform_11(%arg0: i32, %arg1: i32) -> (i32, i32) {
    %c0_i32 = arith.constant 0 : i32
    %c0_i32_0 = arith.constant 0 : i32
    return %arg0, %c0_i32 : i32, i32
  }
}

</mosaic_0001>

<llo_original>
// kernel: tpu_custom_call.1
$region0: #{tpu_custom_call.1}
  #allocation0 [shape = 'u32[]', space=smem, size = 0x4, offset = 0x4, fixed_abs, tag = 'smem constant byte address 0x4 - core index']
  #allocation1 [shape = 'u32[144,128]{1,0:T(1,128)}', space=vmem, size = 0x12000, scoped, tag = 'internal scratch']
  #allocation2 [shape = 'f32[16,32]{1,0:T(8,128)}', space=vmem, size = 0x2000, scoped, tag = 'scratch operand']
  #allocation3 [shape = 'f32[16,32]{1,0:T(8,128)}', space=vmem, size = 0x2000, scoped, tag = 'scratch operand']
  #allocation4 [shape = 'f32[16,32]{1,0:T(8,128)}', space=vmem, size = 0x2000, scoped, tag = 'scratch operand']
  %s0 = inlined_call_operand.vmem [shape: f32[16,32], index: 0, kind: input, shape index: {}]
  %s1 = inlined_call_operand.vmem [shape: f32[1,32,96], index: 1, kind: input, shape index: {}]
  %s2 = inlined_call_operand.vmem [shape: f32[1,1,96], index: 2, kind: input, shape index: {}]
  %s3 = inlined_call_operand.vmem [shape: f32[1,32,32], index: 3, kind: input, shape index: {}]
  %s4 = inlined_call_operand.vmem [shape: f32[1,32], index: 4, kind: input, shape index: {}]
  %s5 = inlined_call_operand.vmem [shape: f32[1,32], index: 5, kind: input, shape index: {}]
  %s6 = inlined_call_operand.vmem [shape: f32[1,32], index: 6, kind: input, shape index: {}]
  %s7 = inlined_call_operand.vmem [shape: f32[32,128], index: 7, kind: input, shape index: {}]
  %s8 = inlined_call_operand.vmem [shape: f32[1,128], index: 8, kind: input, shape index: {}]
  %s9 = inlined_call_operand.vmem [shape: f32[128,32], index: 9, kind: input, shape index: {}]
  %s10 = inlined_call_operand.vmem [shape: f32[1,32], index: 10, kind: input, shape index: {}]
  %s11 = inlined_call_operand.hbm [shape: f32[16,32], index: 11, kind: output, shape index: {}]
  %s12 = sld [smem:[#allocation0]]
  $region62: #{tpu_custom_call.1} parent=0
    _
  %s14 = ssub.s32 1, %s12
  %s15 = scalar_select 0, %s14, %s12
  $region1: #{tpu_custom_call.1} parent=0
    #allocation5 [shape = 'u8[8192]{0}', space=vmem, size = 0x2000, scoped, tag = 'output window, operand 0, single buffered']
    #allocation6 [shape = 's32[1]{0}', space=sflag, size = 0x4, scoped, tag = 'scoped memory for tpu_custom_call.1']
    %16 = vsyncpa [#allocation6], 0
    // Predicated region
    $region2: #{tpu_custom_call.1} parent=1 // pred_check
      _
    $region3: #{tpu_custom_call.1} parent=1 // pred_check_branch
      %18 = sbr.rel (0) target = $region5
    $region4: #{tpu_custom_call.1} parent=1 // pred_region
      _
    $region5: #{tpu_custom_call.1} parent=1 // pred_fallthru
      _
    // Predicated region
    $region6: #{tpu_custom_call.1} parent=1 // pred_check
      _
    $region7: #{tpu_custom_call.1} parent=1 // pred_check_branch
      %20 = sbr.rel (0) target = $region9
    $region8: #{tpu_custom_call.1} parent=1 // pred_region
      _
    $region9: #{tpu_custom_call.1} parent=1 // pred_fallthru
      _
    // Predicated region
    $region10: #{tpu_custom_call.1} parent=1 // pred_check
      _
    $region11: #{tpu_custom_call.1} parent=1 // pred_check_branch
      %22 = sbr.rel (0) target = $region13
    $region12: #{tpu_custom_call.1} parent=1 // pred_region
      _
    $region13: #{tpu_custom_call.1} parent=1 // pred_fallthru
      _
    // Predicated region
    $region14: #{tpu_custom_call.1} parent=1 // pred_check
      _
    $region15: #{tpu_custom_call.1} parent=1 // pred_check_branch
      %24 = sbr.rel (0) target = $region17
    $region16: #{tpu_custom_call.1} parent=1 // pred_region
      _
    $region17: #{tpu_custom_call.1} parent=1 // pred_fallthru
      _
    // Predicated region
    $region18: #{tpu_custom_call.1} parent=1 // pred_check
      _
    $region19: #{tpu_custom_call.1} parent=1 // pred_check_branch
      %26 = sbr.rel (0) target = $region21
    $region20: #{tpu_custom_call.1} parent=1 // pred_region
      _
    $region21: #{tpu_custom_call.1} parent=1 // pred_fallthru
      _
    // Predicated region
    $region22: #{tpu_custom_call.1} parent=1 // pred_check
      _
    $region23: #{tpu_custom_call.1} parent=1 // pred_check_branch
      %28 = sbr.rel (0) target = $region25
    $region24: #{tpu_custom_call.1} parent=1 // pred_region
      _
    $region25: #{tpu_custom_call.1} parent=1 // pred_fallthru
      _
    // Predicated region
    $region26: #{tpu_custom_call.1} parent=1 // pred_check
      _
    $region27: #{tpu_custom_call.1} parent=1 // pred_check_branch
      %30 = sbr.rel (0) target = $region29
    $region28: #{tpu_custom_call.1} parent=1 // pred_region
      _
    $region29: #{tpu_custom_call.1} parent=1 // pred_fallthru
      _
    // Predicated region
    $region30: #{tpu_custom_call.1} parent=1 // pred_check
      _
    $region31: #{tpu_custom_call.1} parent=1 // pred_check_branch
      %32 = sbr.rel (0) target = $region33
    $region32: #{tpu_custom_call.1} parent=1 // pred_region
      _
    $region33: #{tpu_custom_call.1} parent=1 // pred_fallthru
      _
    // Predicated region
    $region34: #{tpu_custom_call.1} parent=1 // pred_check
      _
    $region35: #{tpu_custom_call.1} parent=1 // pred_check_branch
      %34 = sbr.rel (0) target = $region37
    $region36: #{tpu_custom_call.1} parent=1 // pred_region
      _
    $region37: #{tpu_custom_call.1} parent=1 // pred_fallthru
      _
    // Predicated region
    $region38: #{tpu_custom_call.1} parent=1 // pred_check
      _
    $region39: #{tpu_custom_call.1} parent=1 // pred_check_branch
      %36 = sbr.rel (0) target = $region41
    $region40: #{tpu_custom_call.1} parent=1 // pred_region
      _
    $region41: #{tpu_custom_call.1} parent=1 // pred_fallthru
      _
    // Predicated region
    $region42: #{tpu_custom_call.1} parent=1 // pred_check
      _
    $region43: #{tpu_custom_call.1} parent=1 // pred_check_branch
      %38 = sbr.rel (0) target = $region45
    $region44: #{tpu_custom_call.1} parent=1 // pred_region
      _
    $region45: #{tpu_custom_call.1} parent=1 // pred_fallthru
      _
    %p39 = scmp.eq.s32.totalorder 0, 0
    // Predicated region
    $region46: #{tpu_custom_call.1} parent=1 // pred_check
      %p40 = pneg %p39
    $region47: #{tpu_custom_call.1} parent=1 // pred_check_branch
      %42 = sbr.rel (%p40) target = $region49
    $region48: #{tpu_custom_call.1} parent=1 // pred_region
      %v43 = vld [vmem:[%s0] sm:$0xff]
      %v44 = vld [vmem:[%s0 + $0x8] sm:$0xff]
      %vm45 = vcmask 261120
      %46 = vst.msk [vmem:[#allocation3] sm:$0xff] %vm45, %v43
      %47 = vst.msk [vmem:[#allocation3 + $0x8] sm:$0xff] %vm45, %v44
      %v48 = vld [vmem:[%s4] sm:$0x1]
      %v50 = vlaneseq
      %v51 = vshrl.u32 %v50, 7
      %v52 = vsub.s32 0, %v51
      %v53 = vrot.slane %v48, %v52
      %55 = vst.msk [vmem:[#allocation2] sm:$0xff] %vm45, %v53
      %56 = vst.msk [vmem:[#allocation2 + $0x8] sm:$0xff] %vm45, %v53
    $region49: #{tpu_custom_call.1} parent=1 // pred_fallthru
      _
    %v57 = vld [vmem:[#allocation3] sm:$0xff]
    %v58 = vld [vmem:[#allocation3 + $0x8] sm:$0xff]
    %v59 = vld [vmem:[%s1] sm:$0xff]
    %v60 = vld [vmem:[%s1 + $0x8] sm:$0xff]
    %v61 = vld [vmem:[%s1 + $0x10] sm:$0xff]
    %v62 = vld [vmem:[%s1 + $0x18] sm:$0xff]
    %v63 = vld [vmem:[%s2] sm:$0x1]
    %v65 = vlaneseq
    %v66 = vshrl.u32 %v65, 7
    %v67 = vsub.s32 0, %v66
    %v68 = vrot.slane %v63, %v67
    %vm70 = vcmask 261120
    %v72 = vsel %vm70, %v57, 0
    %v75 = vsel %vm70, %v58, 0
    %77 = vmatprep.subr.mxu0 0.0
    %78 = vmatpush1.msra.mxu0 %v59
    %79 = vmatprep.subr.mxu0 0.0
    %80 = vmatpush1.msra.mxu0 %v60
    %81 = vmatprep.subr.mxu0 0.0
    %82 = vmatpush1.msra.mxu0 %v61
    %83 = vmatprep.subr.mxu0 0.0
    %84 = vmatpush1.msra.mxu0 %v62
    %85 = vmatprep.subr.mxu0 0.0
    %86 = vmatpush1.msra.mxu0 0.0
    %87 = vmatprep.subr.mxu0 0.0
    %88 = vmatpush1.msra.mxu0 0.0
    %89 = vmatprep.subr.mxu0 0.0
    %90 = vmatpush1.msra.mxu0 0.0
    %91 = vmatprep.subr.mxu0 0.0
    %92 = vmatpush1.msra.mxu0 0.0
    %93 = vmatprep.subr.mxu0 0.0
    %94 = vmatpush1.msra.mxu0 0.0
    %95 = vmatprep.subr.mxu0 0.0
    %96 = vmatpush1.msra.mxu0 0.0
    %97 = vmatprep.subr.mxu0 0.0
    %98 = vmatpush1.msra.mxu0 0.0
    %99 = vmatprep.subr.mxu0 0.0
    %100 = vmatpush1.msra.mxu0 0.0
    %101 = vmatprep.subr.mxu0 0.0
    %102 = vmatpush1.msra.mxu0 0.0
    %103 = vmatprep.subr.mxu0 0.0
    %104 = vmatpush1.msra.mxu0 0.0
    %105 = vmatprep.subr.mxu0 0.0
    %106 = vmatpush1.msra.mxu0 0.0
    %107 = vmatprep.subr.mxu0 0.0
    %108 = vmatpush1.msra.mxu0 0.0
    %109 = vmatprep.subr.mxu0 0.0
    %110 = vmatpush1.msra.mxu0 0.0
    %111 = vmatprep.subr.mxu0 0.0
    %112 = vmatpush1.msra.mxu0 0.0
    %113 = vmatprep.subr.mxu0 0.0
    %114 = vmatpush1.msra.mxu0 0.0
    %115 = vmatprep.subr.mxu0 0.0
    %116 = vmatpush1.msra.mxu0 0.0
    %117 = vmatprep.subr.mxu0 0.0
    %118 = vmatpush1.msra.mxu0 0.0
    %119 = vmatprep.subr.mxu0 0.0
    %120 = vmatpush1.msra.mxu0 0.0
    %121 = vmatprep.subr.mxu0 0.0
    %122 = vmatpush1.msra.mxu0 0.0
    %123 = vmatprep.subr.mxu0 0.0
    %124 = vmatpush1.msra.mxu0 0.0
    %125 = vmatprep.subr.mxu0 0.0
    %126 = vmatpush1.msra.mxu0 0.0
    %127 = vmatprep.subr.mxu0 0.0
    %128 = vmatpush1.msra.mxu0 0.0
    %129 = vmatprep.subr.mxu0 0.0
    %130 = vmatpush1.msra.mxu0 0.0
    %131 = vmatprep.subr.mxu0 0.0
    %132 = vmatpush1.msra.mxu0 0.0
    %133 = vmatprep.subr.mxu0 0.0
    %134 = vmatpush1.msra.mxu0 0.0
    %135 = vmatprep.subr.mxu0 0.0
    %136 = vmatpush1.msra.mxu0 0.0
    %137 = vmatprep.subr.mxu0 0.0
    %138 = vmatpush1.msra.mxu0 0.0
    %139 = vmatprep.subr.mxu0 0.0
    %140 = vmatpush1.msra.mxu0 0.0
    %141 = vmatprep.mubr.f32.mxu0 0.0
    %142 = vmatmul.mubr.f32.gmra.mrb[0].mxu0 %v72
    %v143 = vpop.f32.mrb[0].mxu0
    %v144 = vadd.f32 %v68, %v143
    %v145 = vpop.f32.mrb[0].mxu0
    %146 = vmatprep.mubr.f32.mxu0 0.0
    %147 = vmatmul.mubr.f32.gmra.mrb[0].mxu0 %v75
    %v148 = vpop.f32.mrb[0].mxu0
    %v149 = vadd.f32 %v68, %v148
    %v150 = vpop.f32.mrb[0].mxu0
    %151 = vdwg.mxu0
    %v152 = vmul.f32 %v144, 0.17677669
    %v153 = vmul.f32 %v149, 0.17677669
    %155 = vrot.lane.b32.xlu0 %v144, 96
    %v156 = vpop.permute.xlu0 %155
    %vm157 = vcmask 64512
    %v159 = vsel %vm157, %v152, 0
    %v161 = vsel %vm157, %v156, 0
    %163 = vmatprep.subr.mxu0 0.0
    %164 = vmatpush1.xpose.msra.mxu0 %v161
    %165 = vmatprep.subr.mxu0 0.0
    %166 = vmatpush1.xpose.msra.mxu0 0.0
    %167 = vmatprep.subr.mxu0 0.0
    %168 = vmatpush1.xpose.msra.mxu0 0.0
    %169 = vmatprep.subr.mxu0 0.0
    %170 = vmatpush1.xpose.msra.mxu0 0.0
    %171 = vmatprep.subr.mxu0 0.0
    %172 = vmatpush1.xpose.msra.mxu0 0.0
    %173 = vmatprep.subr.mxu0 0.0
    %174 = vmatpush1.xpose.msra.mxu0 0.0
    %175 = vmatprep.subr.mxu0 0.0
    %176 = vmatpush1.xpose.msra.mxu0 0.0
    %177 = vmatprep.subr.mxu0 0.0
    %178 = vmatpush1.xpose.msra.mxu0 0.0
    %179 = vmatprep.subr.mxu0 0.0
    %180 = vmatpush1.xpose.msra.mxu0 0.0
    %181 = vmatprep.subr.mxu0 0.0
    %182 = vmatpush1.xpose.msra.mxu0 0.0
    %183 = vmatprep.subr.mxu0 0.0
    %184 = vmatpush1.xpose.msra.mxu0 0.0
    %185 = vmatprep.subr.mxu0 0.0
    %186 = vmatpush1.xpose.msra.mxu0 0.0
    %187 = vmatprep.subr.mxu0 0.0
    %188 = vmatpush1.xpose.msra.mxu0 0.0
    %189 = vmatprep.subr.mxu0 0.0
    %190 = vmatpush1.xpose.msra.mxu0 0.0
    %191 = vmatprep.subr.mxu0 0.0
    %192 = vmatpush1.xpose.msra.mxu0 0.0
    %193 = vmatprep.subr.mxu0 0.0
    %194 = vmatpush1.xpose.msra.mxu0 0.0
    %195 = vmatprep.subr.mxu0 0.0
    %196 = vmatpush1.xpose.msra.mxu0 0.0
    %197 = vmatprep.subr.mxu0 0.0
    %198 = vmatpush1.xpose.msra.mxu0 0.0
    %199 = vmatprep.subr.mxu0 0.0
    %200 = vmatpush1.xpose.msra.mxu0 0.0
    %201 = vmatprep.subr.mxu0 0.0
    %202 = vmatpush1.xpose.msra.mxu0 0.0
    %203 = vmatprep.subr.mxu0 0.0
    %204 = vmatpush1.xpose.msra.mxu0 0.0
    %205 = vmatprep.subr.mxu0 0.0
    %206 = vmatpush1.xpose.msra.mxu0 0.0
    %207 = vmatprep.subr.mxu0 0.0
    %208 = vmatpush1.xpose.msra.mxu0 0.0
    %209 = vmatprep.subr.mxu0 0.0
    %210 = vmatpush1.xpose.msra.mxu0 0.0
    %211 = vmatprep.subr.mxu0 0.0
    %212 = vmatpush1.xpose.msra.mxu0 0.0
    %213 = vmatprep.subr.mxu0 0.0
    %214 = vmatpush1.xpose.msra.mxu0 0.0
    %215 = vmatprep.subr.mxu0 0.0
    %216 = vmatpush1.xpose.msra.mxu0 0.0
    %217 = vmatprep.subr.mxu0 0.0
    %218 = vmatpush1.xpose.msra.mxu0 0.0
    %219 = vmatprep.subr.mxu0 0.0
    %220 = vmatpush1.xpose.msra.mxu0 0.0
    %221 = vmatprep.subr.mxu0 0.0
    %222 = vmatpush1.xpose.msra.mxu0 0.0
    %223 = vmatprep.subr.mxu0 0.0
    %224 = vmatpush1.xpose.msra.mxu0 0.0
    %225 = vmatprep.subr.mxu0 0.0
    %226 = vmatpush1.xpose.msra.mxu0 0.0
    %227 = vmatprep.mubr.f32.mxu0 0.0
    %228 = vmatmul.mubr.f32.gmra.mrb[0].mxu0 %v159
    %v229 = vpop.f32.mrb[0].mxu0
    %v230 = vadd.f32 0.0, %v229
    %v231 = vpop.f32.mrb[0].mxu0
    %232 = vdwg.mxu0
    %234 = vrot.lane.b32.xlu0 %v149, 96
    %v235 = vpop.permute.xlu0 %234
    %v237 = vsel %vm157, %v153, 0
    %v239 = vsel %vm157, %v235, 0
    %241 = vmatprep.subr.mxu0 0.0
    %242 = vmatpush1.xpose.msra.mxu0 %v239
    %243 = vmatprep.subr.mxu0 0.0
    %244 = vmatpush1.xpose.msra.mxu0 0.0
    %245 = vmatprep.subr.mxu0 0.0
    %246 = vmatpush1.xpose.msra.mxu0 0.0
    %247 = vmatprep.subr.mxu0 0.0
    %248 = vmatpush1.xpose.msra.mxu0 0.0
    %249 = vmatprep.subr.mxu0 0.0
    %250 = vmatpush1.xpose.msra.mxu0 0.0
    %251 = vmatprep.subr.mxu0 0.0
    %252 = vmatpush1.xpose.msra.mxu0 0.0
    %253 = vmatprep.subr.mxu0 0.0
    %254 = vmatpush1.xpose.msra.mxu0 0.0
    %255 = vmatprep.subr.mxu0 0.0
    %256 = vmatpush1.xpose.msra.mxu0 0.0
    %257 = vmatprep.subr.mxu0 0.0
    %258 = vmatpush1.xpose.msra.mxu0 0.0
    %259 = vmatprep.subr.mxu0 0.0
    %260 = vmatpush1.xpose.msra.mxu0 0.0
    %261 = vmatprep.subr.mxu0 0.0
    %262 = vmatpush1.xpose.msra.mxu0 0.0
    %263 = vmatprep.subr.mxu0 0.0
    %264 = vmatpush1.xpose.msra.mxu0 0.0
    %265 = vmatprep.subr.mxu0 0.0
    %266 = vmatpush1.xpose.msra.mxu0 0.0
    %267 = vmatprep.subr.mxu0 0.0
    %268 = vmatpush1.xpose.msra.mxu0 0.0
    %269 = vmatprep.subr.mxu0 0.0
    %270 = vmatpush1.xpose.msra.mxu0 0.0
    %271 = vmatprep.subr.mxu0 0.0
    %272 = vmatpush1.xpose.msra.mxu0 0.0
    %273 = vmatprep.subr.mxu0 0.0
    %274 = vmatpush1.xpose.msra.mxu0 0.0
    %275 = vmatprep.subr.mxu0 0.0
    %276 = vmatpush1.xpose.msra.mxu0 0.0
    %277 = vmatprep.subr.mxu0 0.0
    %278 = vmatpush1.xpose.msra.mxu0 0.0
    %279 = vmatprep.subr.mxu0 0.0
    %280 = vmatpush1.xpose.msra.mxu0 0.0
    %281 = vmatprep.subr.mxu0 0.0
    %282 = vmatpush1.xpose.msra.mxu0 0.0
    %283 = vmatprep.subr.mxu0 0.0
    %284 = vmatpush1.xpose.msra.mxu0 0.0
    %285 = vmatprep.subr.mxu0 0.0
    %286 = vmatpush1.xpose.msra.mxu0 0.0
    %287 = vmatprep.subr.mxu0 0.0
    %288 = vmatpush1.xpose.msra.mxu0 0.0
    %289 = vmatprep.subr.mxu0 0.0
    %290 = vmatpush1.xpose.msra.mxu0 0.0
    %291 = vmatprep.subr.mxu0 0.0
    %292 = vmatpush1.xpose.msra.mxu0 0.0
    %293 = vmatprep.subr.mxu0 0.0
    %294 = vmatpush1.xpose.msra.mxu0 0.0
    %295 = vmatprep.subr.mxu0 0.0
    %296 = vmatpush1.xpose.msra.mxu0 0.0
    %297 = vmatprep.subr.mxu0 0.0
    %298 = vmatpush1.xpose.msra.mxu0 0.0
    %299 = vmatprep.subr.mxu0 0.0
    %300 = vmatpush1.xpose.msra.mxu0 0.0
    %301 = vmatprep.subr.mxu0 0.0
    %302 = vmatpush1.xpose.msra.mxu0 0.0
    %303 = vmatprep.subr.mxu0 0.0
    %304 = vmatpush1.xpose.msra.mxu0 0.0
    %305 = vmatprep.mubr.f32.mxu0 0.0
    %306 = vmatmul.mubr.f32.gmra.mrb[0].mxu0 %v237
    %v307 = vpop.f32.mrb[0].mxu0
    %v308 = vadd.f32 0.0, %v307
    %v309 = vpop.f32.mrb[0].mxu0
    %310 = vdwg.mxu0
    %v311 = vsel %vm157, %v230, -inf
    %312 = vmax.xlane.f32.xlu0 %v311
    %v313 = vpop.xlane.xlu0 %312
    %v314 = vsel %vm157, %v308, -inf
    %315 = vmax.xlane.f32.xlu0 %v314
    %v316 = vpop.xlane.xlu0 %315
    %v317 = vsub.f32 %v230, %v313
    %v318 = vsub.f32 %v308, %v316
    %v319 = vmul.f32 %v317, 1.442695
    %v320 = vpow.pop %v319
    %v321 = vmul.f32 %v318, 1.442695
    %v322 = vpow.pop %v321
    %v323 = vsel %vm157, %v320, 0.0
    %324 = vadd.xlane.f32.xlu0 %v323
    %v325 = vpop.xlane.xlu0 %324
    %v326 = vsel %vm157, %v322, 0.0
    %327 = vadd.xlane.f32.xlu0 %v326
    %v328 = vpop.xlane.xlu0 %327
    %v329 = vrcp.pop %v325
    %v330 = vrcp.pop %v328
    %v331 = vmul.f32 %v320, %v329
    %v332 = vmul.f32 %v322, %v330
    %333 = vrot.lane.b32.xlu0 %v144, 64
    %v334 = vpop.permute.xlu0 %333
    %v337 = vsel %vm157, %v331, 0
    %339 = vmatprep.subr.mxu0 0.0
    %340 = vmatpush1.msra.mxu0 %v334
    %341 = vmatprep.subr.mxu0 0.0
    %342 = vmatpush1.msra.mxu0 0.0
    %343 = vmatprep.subr.mxu0 0.0
    %344 = vmatpush1.msra.mxu0 0.0
    %345 = vmatprep.subr.mxu0 0.0
    %346 = vmatpush1.msra.mxu0 0.0
    %347 = vmatprep.subr.mxu0 0.0
    %348 = vmatpush1.msra.mxu0 0.0
    %349 = vmatprep.subr.mxu0 0.0
    %350 = vmatpush1.msra.mxu0 0.0
    %351 = vmatprep.subr.mxu0 0.0
    %352 = vmatpush1.msra.mxu0 0.0
    %353 = vmatprep.subr.mxu0 0.0
    %354 = vmatpush1.msra.mxu0 0.0
    %355 = vmatprep.subr.mxu0 0.0
    %356 = vmatpush1.msra.mxu0 0.0
    %357 = vmatprep.subr.mxu0 0.0
    %358 = vmatpush1.msra.mxu0 0.0
    %359 = vmatprep.subr.mxu0 0.0
    %360 = vmatpush1.msra.mxu0 0.0
    %361 = vmatprep.subr.mxu0 0.0
    %362 = vmatpush1.msra.mxu0 0.0
    %363 = vmatprep.subr.mxu0 0.0
    %364 = vmatpush1.msra.mxu0 0.0
    %365 = vmatprep.subr.mxu0 0.0
    %366 = vmatpush1.msra.mxu0 0.0
    %367 = vmatprep.subr.mxu0 0.0
    %368 = vmatpush1.msra.mxu0 0.0
    %369 = vmatprep.subr.mxu0 0.0
    %370 = vmatpush1.msra.mxu0 0.0
    %371 = vmatprep.subr.mxu0 0.0
    %372 = vmatpush1.msra.mxu0 0.0
    %373 = vmatprep.subr.mxu0 0.0
    %374 = vmatpush1.msra.mxu0 0.0
    %375 = vmatprep.subr.mxu0 0.0
    %376 = vmatpush1.msra.mxu0 0.0
    %377 = vmatprep.subr.mxu0 0.0
    %378 = vmatpush1.msra.mxu0 0.0
    %379 = vmatprep.subr.mxu0 0.0
    %380 = vmatpush1.msra.mxu0 0.0
    %381 = vmatprep.subr.mxu0 0.0
    %382 = vmatpush1.msra.mxu0 0.0
    %383 = vmatprep.subr.mxu0 0.0
    %384 = vmatpush1.msra.mxu0 0.0
    %385 = vmatprep.subr.mxu0 0.0
    %386 = vmatpush1.msra.mxu0 0.0
    %387 = vmatprep.subr.mxu0 0.0
    %388 = vmatpush1.msra.mxu0 0.0
    %389 = vmatprep.subr.mxu0 0.0
    %390 = vmatpush1.msra.mxu0 0.0
    %391 = vmatprep.subr.mxu0 0.0
    %392 = vmatpush1.msra.mxu0 0.0
    %393 = vmatprep.subr.mxu0 0.0
    %394 = vmatpush1.msra.mxu0 0.0
    %395 = vmatprep.subr.mxu0 0.0
    %396 = vmatpush1.msra.mxu0 0.0
    %397 = vmatprep.subr.mxu0 0.0
    %398 = vmatpush1.msra.mxu0 0.0
    %399 = vmatprep.subr.mxu0 0.0
    %400 = vmatpush1.msra.mxu0 0.0
    %401 = vmatprep.subr.mxu0 0.0
    %402 = vmatpush1.msra.mxu0 0.0
    %403 = vmatprep.mubr.f32.mxu0 0.0
    %404 = vmatmul.mubr.f32.gmra.mrb[0].mxu0 %v337
    %v405 = vpop.f32.mrb[0].mxu0
    %v406 = vadd.f32 0.0, %v405
    %v407 = vpop.f32.mrb[0].mxu0
    %408 = vdwg.mxu0
    %409 = vrot.lane.b32.xlu0 %v149, 64
    %v410 = vpop.permute.xlu0 %409
    %v413 = vsel %vm157, %v332, 0
    %415 = vmatprep.subr.mxu0 0.0
    %416 = vmatpush1.msra.mxu0 %v410
    %417 = vmatprep.subr.mxu0 0.0
    %418 = vmatpush1.msra.mxu0 0.0
    %419 = vmatprep.subr.mxu0 0.0
    %420 = vmatpush1.msra.mxu0 0.0
    %421 = vmatprep.subr.mxu0 0.0
    %422 = vmatpush1.msra.mxu0 0.0
    %423 = vmatprep.subr.mxu0 0.0
    %424 = vmatpush1.msra.mxu0 0.0
    %425 = vmatprep.subr.mxu0 0.0
    %426 = vmatpush1.msra.mxu0 0.0
    %427 = vmatprep.subr.mxu0 0.0
    %428 = vmatpush1.msra.mxu0 0.0
    %429 = vmatprep.subr.mxu0 0.0
    %430 = vmatpush1.msra.mxu0 0.0
    %431 = vmatprep.subr.mxu0 0.0
    %432 = vmatpush1.msra.mxu0 0.0
    %433 = vmatprep.subr.mxu0 0.0
    %434 = vmatpush1.msra.mxu0 0.0
    %435 = vmatprep.subr.mxu0 0.0
    %436 = vmatpush1.msra.mxu0 0.0
    %437 = vmatprep.subr.mxu0 0.0
    %438 = vmatpush1.msra.mxu0 0.0
    %439 = vmatprep.subr.mxu0 0.0
    %440 = vmatpush1.msra.mxu0 0.0
    %441 = vmatprep.subr.mxu0 0.0
    %442 = vmatpush1.msra.mxu0 0.0
    %443 = vmatprep.subr.mxu0 0.0
    %444 = vmatpush1.msra.mxu0 0.0
    %445 = vmatprep.subr.mxu0 0.0
    %446 = vmatpush1.msra.mxu0 0.0
    %447 = vmatprep.subr.mxu0 0.0
    %448 = vmatpush1.msra.mxu0 0.0
    %449 = vmatprep.subr.mxu0 0.0
    %450 = vmatpush1.msra.mxu0 0.0
    %451 = vmatprep.subr.mxu0 0.0
    %452 = vmatpush1.msra.mxu0 0.0
    %453 = vmatprep.subr.mxu0 0.0
    %454 = vmatpush1.msra.mxu0 0.0
    %455 = vmatprep.subr.mxu0 0.0
    %456 = vmatpush1.msra.mxu0 0.0
    %457 = vmatprep.subr.mxu0 0.0
    %458 = vmatpush1.msra.mxu0 0.0
    %459 = vmatprep.subr.mxu0 0.0
    %460 = vmatpush1.msra.mxu0 0.0
    %461 = vmatprep.subr.mxu0 0.0
    %462 = vmatpush1.msra.mxu0 0.0
    %463 = vmatprep.subr.mxu0 0.0
    %464 = vmatpush1.msra.mxu0 0.0
    %465 = vmatprep.subr.mxu0 0.0
    %466 = vmatpush1.msra.mxu0 0.0
    %467 = vmatprep.subr.mxu0 0.0
    %468 = vmatpush1.msra.mxu0 0.0
    %469 = vmatprep.subr.mxu0 0.0
    %470 = vmatpush1.msra.mxu0 0.0
    %471 = vmatprep.subr.mxu0 0.0
    %472 = vmatpush1.msra.mxu0 0.0
    %473 = vmatprep.subr.mxu0 0.0
    %474 = vmatpush1.msra.mxu0 0.0
    %475 = vmatprep.subr.mxu0 0.0
    %476 = vmatpush1.msra.mxu0 0.0
    %477 = vmatprep.subr.mxu0 0.0
    %478 = vmatpush1.msra.mxu0 0.0
    %479 = vmatprep.mubr.f32.mxu0 0.0
    %480 = vmatmul.mubr.f32.gmra.mrb[0].mxu0 %v413
    %v481 = vpop.f32.mrb[0].mxu0
    %v482 = vadd.f32 0.0, %v481
    %v483 = vpop.f32.mrb[0].mxu0
    %484 = vdwg.mxu0
    %485 = vst.msk [vmem:[#allocation4] sm:$0xff] %vm157, %v406
    %486 = vst.msk [vmem:[#allocation4 + $0x8] sm:$0xff] %vm157, %v482
    %487 = vrot.lane.b32.xlu0 %v152, 120
    %v488 = vpop.permute.xlu0 %487
    %489 = vrot.lane.b32.xlu0 %v144, 88
    %v490 = vpop.permute.xlu0 %489
    %v491 = vsel %vm157, %v488, 0
    %v493 = vsel %vm157, %v490, 0
    %495 = vmatprep.subr.mxu0 0.0
    %496 = vmatpush1.xpose.msra.mxu0 %v493
    %497 = vmatprep.subr.mxu0 0.0
    %498 = vmatpush1.xpose.msra.mxu0 0.0
    %499 = vmatprep.subr.mxu0 0.0
    %500 = vmatpush1.xpose.msra.mxu0 0.0
    %501 = vmatprep.subr.mxu0 0.0
    %502 = vmatpush1.xpose.msra.mxu0 0.0
    %503 = vmatprep.subr.mxu0 0.0
    %504 = vmatpush1.xpose.msra.mxu0 0.0
    %505 = vmatprep.subr.mxu0 0.0
    %506 = vmatpush1.xpose.msra.mxu0 0.0
    %507 = vmatprep.subr.mxu0 0.0
    %508 = vmatpush1.xpose.msra.mxu0 0.0
    %509 = vmatprep.subr.mxu0 0.0
    %510 = vmatpush1.xpose.msra.mxu0 0.0
    %511 = vmatprep.subr.mxu0 0.0
    %512 = vmatpush1.xpose.msra.mxu0 0.0
    %513 = vmatprep.subr.mxu0 0.0
    %514 = vmatpush1.xpose.msra.mxu0 0.0
    %515 = vmatprep.subr.mxu0 0.0
    %516 = vmatpush1.xpose.msra.mxu0 0.0
    %517 = vmatprep.subr.mxu0 0.0
    %518 = vmatpush1.xpose.msra.mxu0 0.0
    %519 = vmatprep.subr.mxu0 0.0
    %520 = vmatpush1.xpose.msra.mxu0 0.0
    %521 = vmatprep.subr.mxu0 0.0
    %522 = vmatpush1.xpose.msra.mxu0 0.0
    %523 = vmatprep.subr.mxu0 0.0
    %524 = vmatpush1.xpose.msra.mxu0 0.0
    %525 = vmatprep.subr.mxu0 0.0
    %526 = vmatpush1.xpose.msra.mxu0 0.0
    %527 = vmatprep.subr.mxu0 0.0
    %528 = vmatpush1.xpose.msra.mxu0 0.0
    %529 = vmatprep.subr.mxu0 0.0
    %530 = vmatpush1.xpose.msra.mxu0 0.0
    %531 = vmatprep.subr.mxu0 0.0
    %532 = vmatpush1.xpose.msra.mxu0 0.0
    %533 = vmatprep.subr.mxu0 0.0
    %534 = vmatpush1.xpose.msra.mxu0 0.0
    %535 = vmatprep.subr.mxu0 0.0
    %536 = vmatpush1.xpose.msra.mxu0 0.0
    %537 = vmatprep.subr.mxu0 0.0
    %538 = vmatpush1.xpose.msra.mxu0 0.0
    %539 = vmatprep.subr.mxu0 0.0
    %540 = vmatpush1.xpose.msra.mxu0 0.0
    %541 = vmatprep.subr.mxu0 0.0
    %542 = vmatpush1.xpose.msra.mxu0 0.0
    %543 = vmatprep.subr.mxu0 0.0
    %544 = vmatpush1.xpose.msra.mxu0 0.0
    %545 = vmatprep.subr.mxu0 0.0
    %546 = vmatpush1.xpose.msra.mxu0 0.0
    %547 = vmatprep.subr.mxu0 0.0
    %548 = vmatpush1.xpose.msra.mxu0 0.0
    %549 = vmatprep.subr.mxu0 0.0
    %550 = vmatpush1.xpose.msra.mxu0 0.0
    %551 = vmatprep.subr.mxu0 0.0
    %552 = vmatpush1.xpose.msra.mxu0 0.0
    %553 = vmatprep.subr.mxu0 0.0
    %554 = vmatpush1.xpose.msra.mxu0 0.0
    %555 = vmatprep.subr.mxu0 0.0
    %556 = vmatpush1.xpose.msra.mxu0 0.0
    %557 = vmatprep.subr.mxu0 0.0
    %558 = vmatpush1.xpose.msra.mxu0 0.0
    %559 = vmatprep.mubr.f32.mxu0 0.0
    %560 = vmatmul.mubr.f32.gmra.mrb[0].mxu0 %v491
    %v561 = vpop.f32.mrb[0].mxu0
    %v562 = vadd.f32 0.0, %v561
    %v563 = vpop.f32.mrb[0].mxu0
    %564 = vdwg.mxu0
    %565 = vrot.lane.b32.xlu0 %v153, 120
    %v566 = vpop.permute.xlu0 %565
    %567 = vrot.lane.b32.xlu0 %v149, 88
    %v568 = vpop.permute.xlu0 %567
    %v569 = vsel %vm157, %v566, 0
    %v571 = vsel %vm157, %v568, 0
    %573 = vmatprep.subr.mxu0 0.0
    %574 = vmatpush1.xpose.msra.mxu0 %v571
    %575 = vmatprep.subr.mxu0 0.0
    %576 = vmatpush1.xpose.msra.mxu0 0.0
    %577 = vmatprep.subr.mxu0 0.0
    %578 = vmatpush1.xpose.msra.mxu0 0.0
    %579 = vmatprep.subr.mxu0 0.0
    %580 = vmatpush1.xpose.msra.mxu0 0.0
    %581 = vmatprep.subr.mxu0 0.0
    %582 = vmatpush1.xpose.msra.mxu0 0.0
    %583 = vmatprep.subr.mxu0 0.0
    %584 = vmatpush1.xpose.msra.mxu0 0.0
    %585 = vmatprep.subr.mxu0 0.0
    %586 = vmatpush1.xpose.msra.mxu0 0.0
    %587 = vmatprep.subr.mxu0 0.0
    %588 = vmatpush1.xpose.msra.mxu0 0.0
    %589 = vmatprep.subr.mxu0 0.0
    %590 = vmatpush1.xpose.msra.mxu0 0.0
    %591 = vmatprep.subr.mxu0 0.0
    %592 = vmatpush1.xpose.msra.mxu0 0.0
    %593 = vmatprep.subr.mxu0 0.0
    %594 = vmatpush1.xpose.msra.mxu0 0.0
    %595 = vmatprep.subr.mxu0 0.0
    %596 = vmatpush1.xpose.msra.mxu0 0.0
    %597 = vmatprep.subr.mxu0 0.0
    %598 = vmatpush1.xpose.msra.mxu0 0.0
    %599 = vmatprep.subr.mxu0 0.0
    %600 = vmatpush1.xpose.msra.mxu0 0.0
    %601 = vmatprep.subr.mxu0 0.0
    %602 = vmatpush1.xpose.msra.mxu0 0.0
    %603 = vmatprep.subr.mxu0 0.0
    %604 = vmatpush1.xpose.msra.mxu0 0.0
    %605 = vmatprep.subr.mxu0 0.0
    %606 = vmatpush1.xpose.msra.mxu0 0.0
    %607 = vmatprep.subr.mxu0 0.0
    %608 = vmatpush1.xpose.msra.mxu0 0.0
    %609 = vmatprep.subr.mxu0 0.0
    %610 = vmatpush1.xpose.msra.mxu0 0.0
    %611 = vmatprep.subr.mxu0 0.0
    %612 = vmatpush1.xpose.msra.mxu0 0.0
    %613 = vmatprep.subr.mxu0 0.0
    %614 = vmatpush1.xpose.msra.mxu0 0.0
    %615 = vmatprep.subr.mxu0 0.0
    %616 = vmatpush1.xpose.msra.mxu0 0.0
    %617 = vmatprep.subr.mxu0 0.0
    %618 = vmatpush1.xpose.msra.mxu0 0.0
    %619 = vmatprep.subr.mxu0 0.0
    %620 = vmatpush1.xpose.msra.mxu0 0.0
    %621 = vmatprep.subr.mxu0 0.0
    %622 = vmatpush1.xpose.msra.mxu0 0.0
    %623 = vmatprep.subr.mxu0 0.0
    %624 = vmatpush1.xpose.msra.mxu0 0.0
    %625 = vmatprep.subr.mxu0 0.0
    %626 = vmatpush1.xpose.msra.mxu0 0.0
    %627 = vmatprep.subr.mxu0 0.0
    %628 = vmatpush1.xpose.msra.mxu0 0.0
    %629 = vmatprep.subr.mxu0 0.0
    %630 = vmatpush1.xpose.msra.mxu0 0.0
    %631 = vmatprep.subr.mxu0 0.0
    %632 = vmatpush1.xpose.msra.mxu0 0.0
    %633 = vmatprep.subr.mxu0 0.0
    %634 = vmatpush1.xpose.msra.mxu0 0.0
    %635 = vmatprep.subr.mxu0 0.0
    %636 = vmatpush1.xpose.msra.mxu0 0.0
    %637 = vmatprep.mubr.f32.mxu0 0.0
    %638 = vmatmul.mubr.f32.gmra.mrb[0].mxu0 %v569
    %v639 = vpop.f32.mrb[0].mxu0
    %v640 = vadd.f32 0.0, %v639
    %v641 = vpop.f32.mrb[0].mxu0
    %642 = vdwg.mxu0
    %v643 = vsel %vm157, %v562, -inf
    %644 = vmax.xlane.f32.xlu0 %v643
    %v645 = vpop.xlane.xlu0 %644
    %v646 = vsel %vm157, %v640, -inf
    %647 = vmax.xlane.f32.xlu0 %v646
    %v648 = vpop.xlane.xlu0 %647
    %v649 = vsub.f32 %v562, %v645
    %v650 = vsub.f32 %v640, %v648
    %v651 = vmul.f32 %v649, 1.442695
    %v652 = vpow.pop %v651
    %v653 = vmul.f32 %v650, 1.442695
    %v654 = vpow.pop %v653
    %v655 = vsel %vm157, %v652, 0.0
    %656 = vadd.xlane.f32.xlu0 %v655
    %v657 = vpop.xlane.xlu0 %656
    %v658 = vsel %vm157, %v654, 0.0
    %659 = vadd.xlane.f32.xlu0 %v658
    %v660 = vpop.xlane.xlu0 %659
    %v661 = vrcp.pop %v657
    %v662 = vrcp.pop %v660
    %v663 = vmul.f32 %v652, %v661
    %v664 = vmul.f32 %v654, %v662
    %665 = vrot.lane.b32.xlu0 %v144, 56
    %v666 = vpop.permute.xlu0 %665
    %v669 = vsel %vm157, %v663, 0
    %671 = vmatprep.subr.mxu0 0.0
    %672 = vmatpush1.msra.mxu0 %v666
    %673 = vmatprep.subr.mxu0 0.0
    %674 = vmatpush1.msra.mxu0 0.0
    %675 = vmatprep.subr.mxu0 0.0
    %676 = vmatpush1.msra.mxu0 0.0
    %677 = vmatprep.subr.mxu0 0.0
    %678 = vmatpush1.msra.mxu0 0.0
    %679 = vmatprep.subr.mxu0 0.0
    %680 = vmatpush1.msra.mxu0 0.0
    %681 = vmatprep.subr.mxu0 0.0
    %682 = vmatpush1.msra.mxu0 0.0
    %683 = vmatprep.subr.mxu0 0.0
    %684 = vmatpush1.msra.mxu0 0.0
    %685 = vmatprep.subr.mxu0 0.0
    %686 = vmatpush1.msra.mxu0 0.0
    %687 = vmatprep.subr.mxu0 0.0
    %688 = vmatpush1.msra.mxu0 0.0
    %689 = vmatprep.subr.mxu0 0.0
    %690 = vmatpush1.msra.mxu0 0.0
    %691 = vmatprep.subr.mxu0 0.0
    %692 = vmatpush1.msra.mxu0 0.0
    %693 = vmatprep.subr.mxu0 0.0
    %694 = vmatpush1.msra.mxu0 0.0
    %695 = vmatprep.subr.mxu0 0.0
    %696 = vmatpush1.msra.mxu0 0.0
    %697 = vmatprep.subr.mxu0 0.0
    %698 = vmatpush1.msra.mxu0 0.0
    %699 = vmatprep.subr.mxu0 0.0
    %700 = vmatpush1.msra.mxu0 0.0
    %701 = vmatprep.subr.mxu0 0.0
    %702 = vmatpush1.msra.mxu0 0.0
    %703 = vmatprep.subr.mxu0 0.0
    %704 = vmatpush1.msra.mxu0 0.0
    %705 = vmatprep.subr.mxu0 0.0
    %706 = vmatpush1.msra.mxu0 0.0
    %707 = vmatprep.subr.mxu0 0.0
    %708 = vmatpush1.msra.mxu0 0.0
    %709 = vmatprep.subr.mxu0 0.0
    %710 = vmatpush1.msra.mxu0 0.0
    %711 = vmatprep.subr.mxu0 0.0
    %712 = vmatpush1.msra.mxu0 0.0
    %713 = vmatprep.subr.mxu0 0.0
    %714 = vmatpush1.msra.mxu0 0.0
    %715 = vmatprep.subr.mxu0 0.0
    %716 = vmatpush1.msra.mxu0 0.0
    %717 = vmatprep.subr.mxu0 0.0
    %718 = vmatpush1.msra.mxu0 0.0
    %719 = vmatprep.subr.mxu0 0.0
    %720 = vmatpush1.msra.mxu0 0.0
    %721 = vmatprep.subr.mxu0 0.0
    %722 = vmatpush1.msra.mxu0 0.0
    %723 = vmatprep.subr.mxu0 0.0
    %724 = vmatpush1.msra.mxu0 0.0
    %725 = vmatprep.subr.mxu0 0.0
    %726 = vmatpush1.msra.mxu0 0.0
    %727 = vmatprep.subr.mxu0 0.0
    %728 = vmatpush1.msra.mxu0 0.0
    %729 = vmatprep.subr.mxu0 0.0
    %730 = vmatpush1.msra.mxu0 0.0
    %731 = vmatprep.subr.mxu0 0.0
    %732 = vmatpush1.msra.mxu0 0.0
    %733 = vmatprep.subr.mxu0 0.0
    %734 = vmatpush1.msra.mxu0 0.0
    %735 = vmatprep.mubr.f32.mxu0 0.0
    %736 = vmatmul.mubr.f32.gmra.mrb[0].mxu0 %v669
    %v737 = vpop.f32.mrb[0].mxu0
    %v738 = vadd.f32 0.0, %v737
    %v739 = vpop.f32.mrb[0].mxu0
    %740 = vdwg.mxu0
    %741 = vrot.lane.b32.xlu0 %v149, 56
    %v742 = vpop.permute.xlu0 %741
    %v745 = vsel %vm157, %v664, 0
    %747 = vmatprep.subr.mxu0 0.0
    %748 = vmatpush1.msra.mxu0 %v742
    %749 = vmatprep.subr.mxu0 0.0
    %750 = vmatpush1.msra.mxu0 0.0
    %751 = vmatprep.subr.mxu0 0.0
    %752 = vmatpush1.msra.mxu0 0.0
    %753 = vmatprep.subr.mxu0 0.0
    %754 = vmatpush1.msra.mxu0 0.0
    %755 = vmatprep.subr.mxu0 0.0
    %756 = vmatpush1.msra.mxu0 0.0
    %757 = vmatprep.subr.mxu0 0.0
    %758 = vmatpush1.msra.mxu0 0.0
    %759 = vmatprep.subr.mxu0 0.0
    %760 = vmatpush1.msra.mxu0 0.0
    %761 = vmatprep.subr.mxu0 0.0
    %762 = vmatpush1.msra.mxu0 0.0
    %763 = vmatprep.subr.mxu0 0.0
    %764 = vmatpush1.msra.mxu0 0.0
    %765 = vmatprep.subr.mxu0 0.0
    %766 = vmatpush1.msra.mxu0 0.0
    %767 = vmatprep.subr.mxu0 0.0
    %768 = vmatpush1.msra.mxu0 0.0
    %769 = vmatprep.subr.mxu0 0.0
    %770 = vmatpush1.msra.mxu0 0.0
    %771 = vmatprep.subr.mxu0 0.0
    %772 = vmatpush1.msra.mxu0 0.0
    %773 = vmatprep.subr.mxu0 0.0
    %774 = vmatpush1.msra.mxu0 0.0
    %775 = vmatprep.subr.mxu0 0.0
    %776 = vmatpush1.msra.mxu0 0.0
    %777 = vmatprep.subr.mxu0 0.0
    %778 = vmatpush1.msra.mxu0 0.0
    %779 = vmatprep.subr.mxu0 0.0
    %780 = vmatpush1.msra.mxu0 0.0
    %781 = vmatprep.subr.mxu0 0.0
    %782 = vmatpush1.msra.mxu0 0.0
    %783 = vmatprep.subr.mxu0 0.0
    %784 = vmatpush1.msra.mxu0 0.0
    %785 = vmatprep.subr.mxu0 0.0
    %786 = vmatpush1.msra.mxu0 0.0
    %787 = vmatprep.subr.mxu0 0.0
    %788 = vmatpush1.msra.mxu0 0.0
    %789 = vmatprep.subr.mxu0 0.0
    %790 = vmatpush1.msra.mxu0 0.0
    %791 = vmatprep.subr.mxu0 0.0
    %792 = vmatpush1.msra.mxu0 0.0
    %793 = vmatprep.subr.mxu0 0.0
    %794 = vmatpush1.msra.mxu0 0.0
    %795 = vmatprep.subr.mxu0 0.0
    %796 = vmatpush1.msra.mxu0 0.0
    %797 = vmatprep.subr.mxu0 0.0
    %798 = vmatpush1.msra.mxu0 0.0
    %799 = vmatprep.subr.mxu0 0.0
    %800 = vmatpush1.msra.mxu0 0.0
    %801 = vmatprep.subr.mxu0 0.0
    %802 = vmatpush1.msra.mxu0 0.0
    %803 = vmatprep.subr.mxu0 0.0
    %804 = vmatpush1.msra.mxu0 0.0
    %805 = vmatprep.subr.mxu0 0.0
    %806 = vmatpush1.msra.mxu0 0.0
    %807 = vmatprep.subr.mxu0 0.0
    %808 = vmatpush1.msra.mxu0 0.0
    %809 = vmatprep.subr.mxu0 0.0
    %810 = vmatpush1.msra.mxu0 0.0
    %811 = vmatprep.mubr.f32.mxu0 0.0
    %812 = vmatmul.mubr.f32.gmra.mrb[0].mxu0 %v745
    %v813 = vpop.f32.mrb[0].mxu0
    %v814 = vadd.f32 0.0, %v813
    %v815 = vpop.f32.mrb[0].mxu0
    %816 = vdwg.mxu0
    %819 = vrot.lane.b32.xlu0 %v738, 8
    %v820 = vpop.permute.xlu0 %819
    %821 = vrot.lane.b32.xlu0 %v814, 8
    %v822 = vpop.permute.xlu0 %821
    %vm825 = vcmask 130112
    %826 = vst.msk [vmem:[#allocation4] sm:$0xff] %vm825, %v820
    %827 = vst.msk [vmem:[#allocation4 + $0x8] sm:$0xff] %vm825, %v822
    %828 = vrot.lane.b32.xlu0 %v152, 112
    %v829 = vpop.permute.xlu0 %828
    %830 = vrot.lane.b32.xlu0 %v144, 80
    %v831 = vpop.permute.xlu0 %830
    %v832 = vsel %vm157, %v829, 0
    %v834 = vsel %vm157, %v831, 0
    %836 = vmatprep.subr.mxu0 0.0
    %837 = vmatpush1.xpose.msra.mxu0 %v834
    %838 = vmatprep.subr.mxu0 0.0
    %839 = vmatpush1.xpose.msra.mxu0 0.0
    %840 = vmatprep.subr.mxu0 0.0
    %841 = vmatpush1.xpose.msra.mxu0 0.0
    %842 = vmatprep.subr.mxu0 0.0
    %843 = vmatpush1.xpose.msra.mxu0 0.0
    %844 = vmatprep.subr.mxu0 0.0
    %845 = vmatpush1.xpose.msra.mxu0 0.0
    %846 = vmatprep.subr.mxu0 0.0
    %847 = vmatpush1.xpose.msra.mxu0 0.0
    %848 = vmatprep.subr.mxu0 0.0
    %849 = vmatpush1.xpose.msra.mxu0 0.0
    %850 = vmatprep.subr.mxu0 0.0
    %851 = vmatpush1.xpose.msra.mxu0 0.0
    %852 = vmatprep.subr.mxu0 0.0
    %853 = vmatpush1.xpose.msra.mxu0 0.0
    %854 = vmatprep.subr.mxu0 0.0
    %855 = vmatpush1.xpose.msra.mxu0 0.0
    %856 = vmatprep.subr.mxu0 0.0
    %857 = vmatpush1.xpose.msra.mxu0 0.0
    %858 = vmatprep.subr.mxu0 0.0
    %859 = vmatpush1.xpose.msra.mxu0 0.0
    %860 = vmatprep.subr.mxu0 0.0
    %861 = vmatpush1.xpose.msra.mxu0 0.0
    %862 = vmatprep.subr.mxu0 0.0
    %863 = vmatpush1.xpose.msra.mxu0 0.0
    %864 = vmatprep.subr.mxu0 0.0
    %865 = vmatpush1.xpose.msra.mxu0 0.0
    %866 = vmatprep.subr.mxu0 0.0
    %867 = vmatpush1.xpose.msra.mxu0 0.0
    %868 = vmatprep.subr.mxu0 0.0
    %869 = vmatpush1.xpose.msra.mxu0 0.0
    %870 = vmatprep.subr.mxu0 0.0
    %871 = vmatpush1.xpose.msra.mxu0 0.0
    %872 = vmatprep.subr.mxu0 0.0
    %873 = vmatpush1.xpose.msra.mxu0 0.0
    %874 = vmatprep.subr.mxu0 0.0
    %875 = vmatpush1.xpose.msra.mxu0 0.0
    %876 = vmatprep.subr.mxu0 0.0
    %877 = vmatpush1.xpose.msra.mxu0 0.0
    %878 = vmatprep.subr.mxu0 0.0
    %879 = vmatpush1.xpose.msra.mxu0 0.0
    %880 = vmatprep.subr.mxu0 0.0
    %881 = vmatpush1.xpose.msra.mxu0 0.0
    %882 = vmatprep.subr.mxu0 0.0
    %883 = vmatpush1.xpose.msra.mxu0 0.0
    %884 = vmatprep.subr.mxu0 0.0
    %885 = vmatpush1.xpose.msra.mxu0 0.0
    %886 = vmatprep.subr.mxu0 0.0
    %887 = vmatpush1.xpose.msra.mxu0 0.0
    %888 = vmatprep.subr.mxu0 0.0
    %889 = vmatpush1.xpose.msra.mxu0 0.0
    %890 = vmatprep.subr.mxu0 0.0
    %891 = vmatpush1.xpose.msra.mxu0 0.0
    %892 = vmatprep.subr.mxu0 0.0
    %893 = vmatpush1.xpose.msra.mxu0 0.0
    %894 = vmatprep.subr.mxu0 0.0
    %895 = vmatpush1.xpose.msra.mxu0 0.0
    %896 = vmatprep.subr.mxu0 0.0
    %897 = vmatpush1.xpose.msra.mxu0 0.0
    %898 = vmatprep.subr.mxu0 0.0
    %899 = vmatpush1.xpose.msra.mxu0 0.0
    %900 = vmatprep.mubr.f32.mxu0 0.0
    %901 = vmatmul.mubr.f32.gmra.mrb[0].mxu0 %v832
    %v902 = vpop.f32.mrb[0].mxu0
    %v903 = vadd.f32 0.0, %v902
    %v904 = vpop.f32.mrb[0].mxu0
    %905 = vdwg.mxu0
    %906 = vrot.lane.b32.xlu0 %v153, 112
    %v907 = vpop.permute.xlu0 %906
    %908 = vrot.lane.b32.xlu0 %v149, 80
    %v909 = vpop.permute.xlu0 %908
    %v910 = vsel %vm157, %v907, 0
    %v912 = vsel %vm157, %v909, 0
    %914 = vmatprep.subr.mxu0 0.0
    %915 = vmatpush1.xpose.msra.mxu0 %v912
    %916 = vmatprep.subr.mxu0 0.0
    %917 = vmatpush1.xpose.msra.mxu0 0.0
    %918 = vmatprep.subr.mxu0 0.0
    %919 = vmatpush1.xpose.msra.mxu0 0.0
    %920 = vmatprep.subr.mxu0 0.0
    %921 = vmatpush1.xpose.msra.mxu0 0.0
    %922 = vmatprep.subr.mxu0 0.0
    %923 = vmatpush1.xpose.msra.mxu0 0.0
    %924 = vmatprep.subr.mxu0 0.0
    %925 = vmatpush1.xpose.msra.mxu0 0.0
    %926 = vmatprep.subr.mxu0 0.0
    %927 = vmatpush1.xpose.msra.mxu0 0.0
    %928 = vmatprep.subr.mxu0 0.0
    %929 = vmatpush1.xpose.msra.mxu0 0.0
    %930 = vmatprep.subr.mxu0 0.0
    %931 = vmatpush1.xpose.msra.mxu0 0.0
    %932 = vmatprep.subr.mxu0 0.0
    %933 = vmatpush1.xpose.msra.mxu0 0.0
    %934 = vmatprep.subr.mxu0 0.0
    %935 = vmatpush1.xpose.msra.mxu0 0.0
    %936 = vmatprep.subr.mxu0 0.0
    %937 = vmatpush1.xpose.msra.mxu0 0.0
    %938 = vmatprep.subr.mxu0 0.0
    %939 = vmatpush1.xpose.msra.mxu0 0.0
    %940 = vmatprep.subr.mxu0 0.0
    %941 = vmatpush1.xpose.msra.mxu0 0.0
    %942 = vmatprep.subr.mxu0 0.0
    %943 = vmatpush1.xpose.msra.mxu0 0.0
    %944 = vmatprep.subr.mxu0 0.0
    %945 = vmatpush1.xpose.msra.mxu0 0.0
    %946 = vmatprep.subr.mxu0 0.0
    %947 = vmatpush1.xpose.msra.mxu0 0.0
    %948 = vmatprep.subr.mxu0 0.0
    %949 = vmatpush1.xpose.msra.mxu0 0.0
    %950 = vmatprep.subr.mxu0 0.0
    %951 = vmatpush1.xpose.msra.mxu0 0.0
    %952 = vmatprep.subr.mxu0 0.0
    %953 = vmatpush1.xpose.msra.mxu0 0.0
    %954 = vmatprep.subr.mxu0 0.0
    %955 = vmatpush1.xpose.msra.mxu0 0.0
    %956 = vmatprep.subr.mxu0 0.0
    %957 = vmatpush1.xpose.msra.mxu0 0.0
    %958 = vmatprep.subr.mxu0 0.0
    %959 = vmatpush1.xpose.msra.mxu0 0.0
    %960 = vmatprep.subr.mxu0 0.0
    %961 = vmatpush1.xpose.msra.mxu0 0.0
    %962 = vmatprep.subr.mxu0 0.0
    %963 = vmatpush1.xpose.msra.mxu0 0.0
    %964 = vmatprep.subr.mxu0 0.0
    %965 = vmatpush1.xpose.msra.mxu0 0.0
    %966 = vmatprep.subr.mxu0 0.0
    %967 = vmatpush1.xpose.msra.mxu0 0.0
    %968 = vmatprep.subr.mxu0 0.0
    %969 = vmatpush1.xpose.msra.mxu0 0.0
    %970 = vmatprep.subr.mxu0 0.0
    %971 = vmatpush1.xpose.msra.mxu0 0.0
    %972 = vmatprep.subr.mxu0 0.0
    %973 = vmatpush1.xpose.msra.mxu0 0.0
    %974 = vmatprep.subr.mxu0 0.0
    %975 = vmatpush1.xpose.msra.mxu0 0.0
    %976 = vmatprep.subr.mxu0 0.0
    %977 = vmatpush1.xpose.msra.mxu0 0.0
    %978 = vmatprep.mubr.f32.mxu0 0.0
    %979 = vmatmul.mubr.f32.gmra.mrb[0].mxu0 %v910
    %v980 = vpop.f32.mrb[0].mxu0
    %v981 = vadd.f32 0.0, %v980
    %v982 = vpop.f32.mrb[0].mxu0
    %983 = vdwg.mxu0
    %v984 = vsel %vm157, %v903, -inf
    %985 = vmax.xlane.f32.xlu0 %v984
    %v986 = vpop.xlane.xlu0 %985
    %v987 = vsel %vm157, %v981, -inf
    %988 = vmax.xlane.f32.xlu0 %v987
    %v989 = vpop.xlane.xlu0 %988
    %v990 = vsub.f32 %v903, %v986
    %v991 = vsub.f32 %v981, %v989
    %v992 = vmul.f32 %v990, 1.442695
    %v993 = vpow.pop %v992
    %v994 = vmul.f32 %v991, 1.442695
    %v995 = vpow.pop %v994
    %v996 = vsel %vm157, %v993, 0.0
    %997 = vadd.xlane.f32.xlu0 %v996
    %v998 = vpop.xlane.xlu0 %997
    %v999 = vsel %vm157, %v995, 0.0
    %1000 = vadd.xlane.f32.xlu0 %v999
    %v1001 = vpop.xlane.xlu0 %1000
    %v1002 = vrcp.pop %v998
    %v1003 = vrcp.pop %v1001
    %v1004 = vmul.f32 %v993, %v1002
    %v1005 = vmul.f32 %v995, %v1003
    %1006 = vrot.lane.b32.xlu0 %v144, 48
    %v1007 = vpop.permute.xlu0 %1006
    %v1010 = vsel %vm157, %v1004, 0
    %1012 = vmatprep.subr.mxu0 0.0
    %1013 = vmatpush1.msra.mxu0 %v1007
    %1014 = vmatprep.subr.mxu0 0.0
    %1015 = vmatpush1.msra.mxu0 0.0
    %1016 = vmatprep.subr.mxu0 0.0
    %1017 = vmatpush1.msra.mxu0 0.0
    %1018 = vmatprep.subr.mxu0 0.0
    %1019 = vmatpush1.msra.mxu0 0.0
    %1020 = vmatprep.subr.mxu0 0.0
    %1021 = vmatpush1.msra.mxu0 0.0
    %1022 = vmatprep.subr.mxu0 0.0
    %1023 = vmatpush1.msra.mxu0 0.0
    %1024 = vmatprep.subr.mxu0 0.0
    %1025 = vmatpush1.msra.mxu0 0.0
    %1026 = vmatprep.subr.mxu0 0.0
    %1027 = vmatpush1.msra.mxu0 0.0
    %1028 = vmatprep.subr.mxu0 0.0
    %1029 = vmatpush1.msra.mxu0 0.0
    %1030 = vmatprep.subr.mxu0 0.0
    %1031 = vmatpush1.msra.mxu0 0.0
    %1032 = vmatprep.subr.mxu0 0.0
    %1033 = vmatpush1.msra.mxu0 0.0
    %1034 = vmatprep.subr.mxu0 0.0
    %1035 = vmatpush1.msra.mxu0 0.0
    %1036 = vmatprep.subr.mxu0 0.0
    %1037 = vmatpush1.msra.mxu0 0.0
    %1038 = vmatprep.subr.mxu0 0.0
    %1039 = vmatpush1.msra.mxu0 0.0
    %1040 = vmatprep.subr.mxu0 0.0
    %1041 = vmatpush1.msra.mxu0 0.0
    %1042 = vmatprep.subr.mxu0 0.0
    %1043 = vmatpush1.msra.mxu0 0.0
    %1044 = vmatprep.subr.mxu0 0.0
    %1045 = vmatpush1.msra.mxu0 0.0
    %1046 = vmatprep.subr.mxu0 0.0
    %1047 = vmatpush1.msra.mxu0 0.0
    %1048 = vmatprep.subr.mxu0 0.0
    %1049 = vmatpush1.msra.mxu0 0.0
    %1050 = vmatprep.subr.mxu0 0.0
    %1051 = vmatpush1.msra.mxu0 0.0
    %1052 = vmatprep.subr.mxu0 0.0
    %1053 = vmatpush1.msra.mxu0 0.0
    %1054 = vmatprep.subr.mxu0 0.0
    %1055 = vmatpush1.msra.mxu0 0.0
    %1056 = vmatprep.subr.mxu0 0.0
    %1057 = vmatpush1.msra.mxu0 0.0
    %1058 = vmatprep.subr.mxu0 0.0
    %1059 = vmatpush1.msra.mxu0 0.0
    %1060 = vmatprep.subr.mxu0 0.0
    %1061 = vmatpush1.msra.mxu0 0.0
    %1062 = vmatprep.subr.mxu0 0.0
    %1063 = vmatpush1.msra.mxu0 0.0
    %1064 = vmatprep.subr.mxu0 0.0
    %1065 = vmatpush1.msra.mxu0 0.0
    %1066 = vmatprep.subr.mxu0 0.0
    %1067 = vmatpush1.msra.mxu0 0.0
    %1068 = vmatprep.subr.mxu0 0.0
    %1069 = vmatpush1.msra.mxu0 0.0
    %1070 = vmatprep.subr.mxu0 0.0
    %1071 = vmatpush1.msra.mxu0 0.0
    %1072 = vmatprep.subr.mxu0 0.0
    %1073 = vmatpush1.msra.mxu0 0.0
    %1074 = vmatprep.subr.mxu0 0.0
    %1075 = vmatpush1.msra.mxu0 0.0
    %1076 = vmatprep.mubr.f32.mxu0 0.0
    %1077 = vmatmul.mubr.f32.gmra.mrb[0].mxu0 %v1010
    %v1078 = vpop.f32.mrb[0].mxu0
    %v1079 = vadd.f32 0.0, %v1078
    %v1080 = vpop.f32.mrb[0].mxu0
    %1081 = vdwg.mxu0
    %1082 = vrot.lane.b32.xlu0 %v149, 48
    %v1083 = vpop.permute.xlu0 %1082
    %v1086 = vsel %vm157, %v1005, 0
    %1088 = vmatprep.subr.mxu0 0.0
    %1089 = vmatpush1.msra.mxu0 %v1083
    %1090 = vmatprep.subr.mxu0 0.0
    %1091 = vmatpush1.msra.mxu0 0.0
    %1092 = vmatprep.subr.mxu0 0.0
    %1093 = vmatpush1.msra.mxu0 0.0
    %1094 = vmatprep.subr.mxu0 0.0
    %1095 = vmatpush1.msra.mxu0 0.0
    %1096 = vmatprep.subr.mxu0 0.0
    %1097 = vmatpush1.msra.mxu0 0.0
    %1098 = vmatprep.subr.mxu0 0.0
    %1099 = vmatpush1.msra.mxu0 0.0
    %1100 = vmatprep.subr.mxu0 0.0
    %1101 = vmatpush1.msra.mxu0 0.0
    %1102 = vmatprep.subr.mxu0 0.0
    %1103 = vmatpush1.msra.mxu0 0.0
    %1104 = vmatprep.subr.mxu0 0.0
    %1105 = vmatpush1.msra.mxu0 0.0
    %1106 = vmatprep.subr.mxu0 0.0
    %1107 = vmatpush1.msra.mxu0 0.0
    %1108 = vmatprep.subr.mxu0 0.0
    %1109 = vmatpush1.msra.mxu0 0.0
    %1110 = vmatprep.subr.mxu0 0.0
    %1111 = vmatpush1.msra.mxu0 0.0
    %1112 = vmatprep.subr.mxu0 0.0
    %1113 = vmatpush1.msra.mxu0 0.0
    %1114 = vmatprep.subr.mxu0 0.0
    %1115 = vmatpush1.msra.mxu0 0.0
    %1116 = vmatprep.subr.mxu0 0.0
    %1117 = vmatpush1.msra.mxu0 0.0
    %1118 = vmatprep.subr.mxu0 0.0
    %1119 = vmatpush1.msra.mxu0 0.0
    %1120 = vmatprep.subr.mxu0 0.0
    %1121 = vmatpush1.msra.mxu0 0.0
    %1122 = vmatprep.subr.mxu0 0.0
    %1123 = vmatpush1.msra.mxu0 0.0
    %1124 = vmatprep.subr.mxu0 0.0
    %1125 = vmatpush1.msra.mxu0 0.0
    %1126 = vmatprep.subr.mxu0 0.0
    %1127 = vmatpush1.msra.mxu0 0.0
    %1128 = vmatprep.subr.mxu0 0.0
    %1129 = vmatpush1.msra.mxu0 0.0
    %1130 = vmatprep.subr.mxu0 0.0
    %1131 = vmatpush1.msra.mxu0 0.0
    %1132 = vmatprep.subr.mxu0 0.0
    %1133 = vmatpush1.msra.mxu0 0.0
    %1134 = vmatprep.subr.mxu0 0.0
    %1135 = vmatpush1.msra.mxu0 0.0
    %1136 = vmatprep.subr.mxu0 0.0
    %1137 = vmatpush1.msra.mxu0 0.0
    %1138 = vmatprep.subr.mxu0 0.0
    %1139 = vmatpush1.msra.mxu0 0.0
    %1140 = vmatprep.subr.mxu0 0.0
    %1141 = vmatpush1.msra.mxu0 0.0
    %1142 = vmatprep.subr.mxu0 0.0
    %1143 = vmatpush1.msra.mxu0 0.0
    %1144 = vmatprep.subr.mxu0 0.0
    %1145 = vmatpush1.msra.mxu0 0.0
    %1146 = vmatprep.subr.mxu0 0.0
    %1147 = vmatpush1.msra.mxu0 0.0
    %1148 = vmatprep.subr.mxu0 0.0
    %1149 = vmatpush1.msra.mxu0 0.0
    %1150 = vmatprep.subr.mxu0 0.0
    %1151 = vmatpush1.msra.mxu0 0.0
    %1152 = vmatprep.mubr.f32.mxu0 0.0
    %1153 = vmatmul.mubr.f32.gmra.mrb[0].mxu0 %v1086
    %v1154 = vpop.f32.mrb[0].mxu0
    %v1155 = vadd.f32 0.0, %v1154
    %v1156 = vpop.f32.mrb[0].mxu0
    %1157 = vdwg.mxu0
    %1160 = vrot.lane.b32.xlu0 %v1079, 16
    %v1161 = vpop.permute.xlu0 %1160
    %1162 = vrot.lane.b32.xlu0 %v1155, 16
    %v1163 = vpop.permute.xlu0 %1162
    %vm1166 = vcmask 195712
    %1167 = vst.msk [vmem:[#allocation4] sm:$0xff] %vm1166, %v1161
    %1168 = vst.msk [vmem:[#allocation4 + $0x8] sm:$0xff] %vm1166, %v1163
    %1169 = vrot.lane.b32.xlu0 %v152, 104
    %v1170 = vpop.permute.xlu0 %1169
    %1171 = vrot.lane.b32.xlu0 %v144, 72
    %v1172 = vpop.permute.xlu0 %1171
    %v1173 = vsel %vm157, %v1170, 0
    %v1175 = vsel %vm157, %v1172, 0
    %1177 = vmatprep.subr.mxu0 0.0
    %1178 = vmatpush1.xpose.msra.mxu0 %v1175
    %1179 = vmatprep.subr.mxu0 0.0
    %1180 = vmatpush1.xpose.msra.mxu0 0.0
    %1181 = vmatprep.subr.mxu0 0.0
    %1182 = vmatpush1.xpose.msra.mxu0 0.0
    %1183 = vmatprep.subr.mxu0 0.0
    %1184 = vmatpush1.xpose.msra.mxu0 0.0
    %1185 = vmatprep.subr.mxu0 0.0
    %1186 = vmatpush1.xpose.msra.mxu0 0.0
    %1187 = vmatprep.subr.mxu0 0.0
    %1188 = vmatpush1.xpose.msra.mxu0 0.0
    %1189 = vmatprep.subr.mxu0 0.0
    %1190 = vmatpush1.xpose.msra.mxu0 0.0
    %1191 = vmatprep.subr.mxu0 0.0
    %1192 = vmatpush1.xpose.msra.mxu0 0.0
    %1193 = vmatprep.subr.mxu0 0.0
    %1194 = vmatpush1.xpose.msra.mxu0 0.0
    %1195 = vmatprep.subr.mxu0 0.0
    %1196 = vmatpush1.xpose.msra.mxu0 0.0
    %1197 = vmatprep.subr.mxu0 0.0
    %1198 = vmatpush1.xpose.msra.mxu0 0.0
    %1199 = vmatprep.subr.mxu0 0.0
    %1200 = vmatpush1.xpose.msra.mxu0 0.0
    %1201 = vmatprep.subr.mxu0 0.0
    %1202 = vmatpush1.xpose.msra.mxu0 0.0
    %1203 = vmatprep.subr.mxu0 0.0
    %1204 = vmatpush1.xpose.msra.mxu0 0.0
    %1205 = vmatprep.subr.mxu0 0.0
    %1206 = vmatpush1.xpose.msra.mxu0 0.0
    %1207 = vmatprep.subr.mxu0 0.0
    %1208 = vmatpush1.xpose.msra.mxu0 0.0
    %1209 = vmatprep.subr.mxu0 0.0
    %1210 = vmatpush1.xpose.msra.mxu0 0.0
    %1211 = vmatprep.subr.mxu0 0.0
    %1212 = vmatpush1.xpose.msra.mxu0 0.0
    %1213 = vmatprep.subr.mxu0 0.0
    %1214 = vmatpush1.xpose.msra.mxu0 0.0
    %1215 = vmatprep.subr.mxu0 0.0
    %1216 = vmatpush1.xpose.msra.mxu0 0.0
    %1217 = vmatprep.subr.mxu0 0.0
    %1218 = vmatpush1.xpose.msra.mxu0 0.0
    %1219 = vmatprep.subr.mxu0 0.0
    %1220 = vmatpush1.xpose.msra.mxu0 0.0
    %1221 = vmatprep.subr.mxu0 0.0
    %1222 = vmatpush1.xpose.msra.mxu0 0.0
    %1223 = vmatprep.subr.mxu0 0.0
    %1224 = vmatpush1.xpose.msra.mxu0 0.0
    %1225 = vmatprep.subr.mxu0 0.0
    %1226 = vmatpush1.xpose.msra.mxu0 0.0
    %1227 = vmatprep.subr.mxu0 0.0
    %1228 = vmatpush1.xpose.msra.mxu0 0.0
    %1229 = vmatprep.subr.mxu0 0.0
    %1230 = vmatpush1.xpose.msra.mxu0 0.0
    %1231 = vmatprep.subr.mxu0 0.0
    %1232 = vmatpush1.xpose.msra.mxu0 0.0
    %1233 = vmatprep.subr.mxu0 0.0
    %1234 = vmatpush1.xpose.msra.mxu0 0.0
    %1235 = vmatprep.subr.mxu0 0.0
    %1236 = vmatpush1.xpose.msra.mxu0 0.0
    %1237 = vmatprep.subr.mxu0 0.0
    %1238 = vmatpush1.xpose.msra.mxu0 0.0
    %1239 = vmatprep.subr.mxu0 0.0
    %1240 = vmatpush1.xpose.msra.mxu0 0.0
    %1241 = vmatprep.mubr.f32.mxu0 0.0
    %1242 = vmatmul.mubr.f32.gmra.mrb[0].mxu0 %v1173
    %v1243 = vpop.f32.mrb[0].mxu0
    %v1244 = vadd.f32 0.0, %v1243
    %v1245 = vpop.f32.mrb[0].mxu0
    %1246 = vdwg.mxu0
    %1247 = vrot.lane.b32.xlu0 %v153, 104
    %v1248 = vpop.permute.xlu0 %1247
    %1249 = vrot.lane.b32.xlu0 %v149, 72
    %v1250 = vpop.permute.xlu0 %1249
    %v1251 = vsel %vm157, %v1248, 0
    %v1253 = vsel %vm157, %v1250, 0
    %1255 = vmatprep.subr.mxu0 0.0
    %1256 = vmatpush1.xpose.msra.mxu0 %v1253
    %1257 = vmatprep.subr.mxu0 0.0
    %1258 = vmatpush1.xpose.msra.mxu0 0.0
    %1259 = vmatprep.subr.mxu0 0.0
    %1260 = vmatpush1.xpose.msra.mxu0 0.0
    %1261 = vmatprep.subr.mxu0 0.0
    %1262 = vmatpush1.xpose.msra.mxu0 0.0
    %1263 = vmatprep.subr.mxu0 0.0
    %1264 = vmatpush1.xpose.msra.mxu0 0.0
    %1265 = vmatprep.subr.mxu0 0.0
    %1266 = vmatpush1.xpose.msra.mxu0 0.0
    %1267 = vmatprep.subr.mxu0 0.0
    %1268 = vmatpush1.xpose.msra.mxu0 0.0
    %1269 = vmatprep.subr.mxu0 0.0
    %1270 = vmatpush1.xpose.msra.mxu0 0.0
    %1271 = vmatprep.subr.mxu0 0.0
    %1272 = vmatpush1.xpose.msra.mxu0 0.0
    %1273 = vmatprep.subr.mxu0 0.0
    %1274 = vmatpush1.xpose.msra.mxu0 0.0
    %1275 = vmatprep.subr.mxu0 0.0
    %1276 = vmatpush1.xpose.msra.mxu0 0.0
    %1277 = vmatprep.subr.mxu0 0.0
    %1278 = vmatpush1.xpose.msra.mxu0 0.0
    %1279 = vmatprep.subr.mxu0 0.0
    %1280 = vmatpush1.xpose.msra.mxu0 0.0
    %1281 = vmatprep.subr.mxu0 0.0
    %1282 = vmatpush1.xpose.msra.mxu0 0.0
    %1283 = vmatprep.subr.mxu0 0.0
    %1284 = vmatpush1.xpose.msra.mxu0 0.0
    %1285 = vmatprep.subr.mxu0 0.0
    %1286 = vmatpush1.xpose.msra.mxu0 0.0
    %1287 = vmatprep.subr.mxu0 0.0
    %1288 = vmatpush1.xpose.msra.mxu0 0.0
    %1289 = vmatprep.subr.mxu0 0.0
    %1290 = vmatpush1.xpose.msra.mxu0 0.0
    %1291 = vmatprep.subr.mxu0 0.0
    %1292 = vmatpush1.xpose.msra.mxu0 0.0
    %1293 = vmatprep.subr.mxu0 0.0
    %1294 = vmatpush1.xpose.msra.mxu0 0.0
    %1295 = vmatprep.subr.mxu0 0.0
    %1296 = vmatpush1.xpose.msra.mxu0 0.0
    %1297 = vmatprep.subr.mxu0 0.0
    %1298 = vmatpush1.xpose.msra.mxu0 0.0
    %1299 = vmatprep.subr.mxu0 0.0
    %1300 = vmatpush1.xpose.msra.mxu0 0.0
    %1301 = vmatprep.subr.mxu0 0.0
    %1302 = vmatpush1.xpose.msra.mxu0 0.0
    %1303 = vmatprep.subr.mxu0 0.0
    %1304 = vmatpush1.xpose.msra.mxu0 0.0
    %1305 = vmatprep.subr.mxu0 0.0
    %1306 = vmatpush1.xpose.msra.mxu0 0.0
    %1307 = vmatprep.subr.mxu0 0.0
    %1308 = vmatpush1.xpose.msra.mxu0 0.0
    %1309 = vmatprep.subr.mxu0 0.0
    %1310 = vmatpush1.xpose.msra.mxu0 0.0
    %1311 = vmatprep.subr.mxu0 0.0
    %1312 = vmatpush1.xpose.msra.mxu0 0.0
    %1313 = vmatprep.subr.mxu0 0.0
    %1314 = vmatpush1.xpose.msra.mxu0 0.0
    %1315 = vmatprep.subr.mxu0 0.0
    %1316 = vmatpush1.xpose.msra.mxu0 0.0
    %1317 = vmatprep.subr.mxu0 0.0
    %1318 = vmatpush1.xpose.msra.mxu0 0.0
    %1319 = vmatprep.mubr.f32.mxu0 0.0
    %1320 = vmatmul.mubr.f32.gmra.mrb[0].mxu0 %v1251
    %v1321 = vpop.f32.mrb[0].mxu0
    %v1322 = vadd.f32 0.0, %v1321
    %v1323 = vpop.f32.mrb[0].mxu0
    %1324 = vdwg.mxu0
    %v1325 = vsel %vm157, %v1244, -inf
    %1326 = vmax.xlane.f32.xlu0 %v1325
    %v1327 = vpop.xlane.xlu0 %1326
    %v1328 = vsel %vm157, %v1322, -inf
    %1329 = vmax.xlane.f32.xlu0 %v1328
    %v1330 = vpop.xlane.xlu0 %1329
    %v1331 = vsub.f32 %v1244, %v1327
    %v1332 = vsub.f32 %v1322, %v1330
    %v1333 = vmul.f32 %v1331, 1.442695
    %v1334 = vpow.pop %v1333
    %v1335 = vmul.f32 %v1332, 1.442695
    %v1336 = vpow.pop %v1335
    %v1337 = vsel %vm157, %v1334, 0.0
    %1338 = vadd.xlane.f32.xlu0 %v1337
    %v1339 = vpop.xlane.xlu0 %1338
    %v1340 = vsel %vm157, %v1336, 0.0
    %1341 = vadd.xlane.f32.xlu0 %v1340
    %v1342 = vpop.xlane.xlu0 %1341
    %v1343 = vrcp.pop %v1339
    %v1344 = vrcp.pop %v1342
    %v1345 = vmul.f32 %v1334, %v1343
    %v1346 = vmul.f32 %v1336, %v1344
    %1347 = vrot.lane.b32.xlu0 %v144, 40
    %v1348 = vpop.permute.xlu0 %1347
    %v1351 = vsel %vm157, %v1345, 0
    %1353 = vmatprep.subr.mxu0 0.0
    %1354 = vmatpush1.msra.mxu0 %v1348
    %1355 = vmatprep.subr.mxu0 0.0
    %1356 = vmatpush1.msra.mxu0 0.0
    %1357 = vmatprep.subr.mxu0 0.0
    %1358 = vmatpush1.msra.mxu0 0.0
    %1359 = vmatprep.subr.mxu0 0.0
    %1360 = vmatpush1.msra.mxu0 0.0
    %1361 = vmatprep.subr.mxu0 0.0
    %1362 = vmatpush1.msra.mxu0 0.0
    %1363 = vmatprep.subr.mxu0 0.0
    %1364 = vmatpush1.msra.mxu0 0.0
    %1365 = vmatprep.subr.mxu0 0.0
    %1366 = vmatpush1.msra.mxu0 0.0
    %1367 = vmatprep.subr.mxu0 0.0
    %1368 = vmatpush1.msra.mxu0 0.0
    %1369 = vmatprep.subr.mxu0 0.0
    %1370 = vmatpush1.msra.mxu0 0.0
    %1371 = vmatprep.subr.mxu0 0.0
    %1372 = vmatpush1.msra.mxu0 0.0
    %1373 = vmatprep.subr.mxu0 0.0
    %1374 = vmatpush1.msra.mxu0 0.0
    %1375 = vmatprep.subr.mxu0 0.0
    %1376 = vmatpush1.msra.mxu0 0.0
    %1377 = vmatprep.subr.mxu0 0.0
    %1378 = vmatpush1.msra.mxu0 0.0
    %1379 = vmatprep.subr.mxu0 0.0
    %1380 = vmatpush1.msra.mxu0 0.0
    %1381 = vmatprep.subr.mxu0 0.0
    %1382 = vmatpush1.msra.mxu0 0.0
    %1383 = vmatprep.subr.mxu0 0.0
    %1384 = vmatpush1.msra.mxu0 0.0
    %1385 = vmatprep.subr.mxu0 0.0
    %1386 = vmatpush1.msra.mxu0 0.0
    %1387 = vmatprep.subr.mxu0 0.0
    %1388 = vmatpush1.msra.mxu0 0.0
    %1389 = vmatprep.subr.mxu0 0.0
    %1390 = vmatpush1.msra.mxu0 0.0
    %1391 = vmatprep.subr.mxu0 0.0
    %1392 = vmatpush1.msra.mxu0 0.0
    %1393 = vmatprep.subr.mxu0 0.0
    %1394 = vmatpush1.msra.mxu0 0.0
    %1395 = vmatprep.subr.mxu0 0.0
    %1396 = vmatpush1.msra.mxu0 0.0
    %1397 = vmatprep.subr.mxu0 0.0
    %1398 = vmatpush1.msra.mxu0 0.0
    %1399 = vmatprep.subr.mxu0 0.0
    %1400 = vmatpush1.msra.mxu0 0.0
    %1401 = vmatprep.subr.mxu0 0.0
    %1402 = vmatpush1.msra.mxu0 0.0
    %1403 = vmatprep.subr.mxu0 0.0
    %1404 = vmatpush1.msra.mxu0 0.0
    %1405 = vmatprep.subr.mxu0 0.0
    %1406 = vmatpush1.msra.mxu0 0.0
    %1407 = vmatprep.subr.mxu0 0.0
    %1408 = vmatpush1.msra.mxu0 0.0
    %1409 = vmatprep.subr.mxu0 0.0
    %1410 = vmatpush1.msra.mxu0 0.0
    %1411 = vmatprep.subr.mxu0 0.0
    %1412 = vmatpush1.msra.mxu0 0.0
    %1413 = vmatprep.subr.mxu0 0.0
    %1414 = vmatpush1.msra.mxu0 0.0
    %1415 = vmatprep.subr.mxu0 0.0
    %1416 = vmatpush1.msra.mxu0 0.0
    %1417 = vmatprep.mubr.f32.mxu0 0.0
    %1418 = vmatmul.mubr.f32.gmra.mrb[0].mxu0 %v1351
    %v1419 = vpop.f32.mrb[0].mxu0
    %v1420 = vadd.f32 0.0, %v1419
    %v1421 = vpop.f32.mrb[0].mxu0
    %1422 = vdwg.mxu0
    %1423 = vrot.lane.b32.xlu0 %v149, 40
    %v1424 = vpop.permute.xlu0 %1423
    %v1427 = vsel %vm157, %v1346, 0
    %1429 = vmatprep.subr.mxu0 0.0
    %1430 = vmatpush1.msra.mxu0 %v1424
    %1431 = vmatprep.subr.mxu0 0.0
    %1432 = vmatpush1.msra.mxu0 0.0
    %1433 = vmatprep.subr.mxu0 0.0
    %1434 = vmatpush1.msra.mxu0 0.0
    %1435 = vmatprep.subr.mxu0 0.0
    %1436 = vmatpush1.msra.mxu0 0.0
    %1437 = vmatprep.subr.mxu0 0.0
    %1438 = vmatpush1.msra.mxu0 0.0
    %1439 = vmatprep.subr.mxu0 0.0
    %1440 = vmatpush1.msra.mxu0 0.0
    %1441 = vmatprep.subr.mxu0 0.0
    %1442 = vmatpush1.msra.mxu0 0.0
    %1443 = vmatprep.subr.mxu0 0.0
    %1444 = vmatpush1.msra.mxu0 0.0
    %1445 = vmatprep.subr.mxu0 0.0
    %1446 = vmatpush1.msra.mxu0 0.0
    %1447 = vmatprep.subr.mxu0 0.0
    %1448 = vmatpush1.msra.mxu0 0.0
    %1449 = vmatprep.subr.mxu0 0.0
    %1450 = vmatpush1.msra.mxu0 0.0
    %1451 = vmatprep.subr.mxu0 0.0
    %1452 = vmatpush1.msra.mxu0 0.0
    %1453 = vmatprep.subr.mxu0 0.0
    %1454 = vmatpush1.msra.mxu0 0.0
    %1455 = vmatprep.subr.mxu0 0.0
    %1456 = vmatpush1.msra.mxu0 0.0
    %1457 = vmatprep.subr.mxu0 0.0
    %1458 = vmatpush1.msra.mxu0 0.0
    %1459 = vmatprep.subr.mxu0 0.0
    %1460 = vmatpush1.msra.mxu0 0.0
    %1461 = vmatprep.subr.mxu0 0.0
    %1462 = vmatpush1.msra.mxu0 0.0
    %1463 = vmatprep.subr.mxu0 0.0
    %1464 = vmatpush1.msra.mxu0 0.0
    %1465 = vmatprep.subr.mxu0 0.0
    %1466 = vmatpush1.msra.mxu0 0.0
    %1467 = vmatprep.subr.mxu0 0.0
    %1468 = vmatpush1.msra.mxu0 0.0
    %1469 = vmatprep.subr.mxu0 0.0
    %1470 = vmatpush1.msra.mxu0 0.0
    %1471 = vmatprep.subr.mxu0 0.0
    %1472 = vmatpush1.msra.mxu0 0.0
    %1473 = vmatprep.subr.mxu0 0.0
    %1474 = vmatpush1.msra.mxu0 0.0
    %1475 = vmatprep.subr.mxu0 0.0
    %1476 = vmatpush1.msra.mxu0 0.0
    %1477 = vmatprep.subr.mxu0 0.0
    %1478 = vmatpush1.msra.mxu0 0.0
    %1479 = vmatprep.subr.mxu0 0.0
    %1480 = vmatpush1.msra.mxu0 0.0
    %1481 = vmatprep.subr.mxu0 0.0
    %1482 = vmatpush1.msra.mxu0 0.0
    %1483 = vmatprep.subr.mxu0 0.0
    %1484 = vmatpush1.msra.mxu0 0.0
    %1485 = vmatprep.subr.mxu0 0.0
    %1486 = vmatpush1.msra.mxu0 0.0
    %1487 = vmatprep.subr.mxu0 0.0
    %1488 = vmatpush1.msra.mxu0 0.0
    %1489 = vmatprep.subr.mxu0 0.0
    %1490 = vmatpush1.msra.mxu0 0.0
    %1491 = vmatprep.subr.mxu0 0.0
    %1492 = vmatpush1.msra.mxu0 0.0
    %1493 = vmatprep.mubr.f32.mxu0 0.0
    %1494 = vmatmul.mubr.f32.gmra.mrb[0].mxu0 %v1427
    %v1495 = vpop.f32.mrb[0].mxu0
    %v1496 = vadd.f32 0.0, %v1495
    %v1497 = vpop.f32.mrb[0].mxu0
    %1498 = vdwg.mxu0
    %1501 = vrot.lane.b32.xlu0 %v1420, 24
    %v1502 = vpop.permute.xlu0 %1501
    %1503 = vrot.lane.b32.xlu0 %v1496, 24
    %v1504 = vpop.permute.xlu0 %1503
    %vm1507 = vcmask 261312
    %1508 = vst.msk [vmem:[#allocation4] sm:$0xff] %vm1507, %v1502
    %1509 = vst.msk [vmem:[#allocation4 + $0x8] sm:$0xff] %vm1507, %v1504
    %v1510 = vld [vmem:[#allocation2] sm:$0xff]
    %v1511 = vld [vmem:[#allocation2 + $0x8] sm:$0xff]
    %v1512 = vld [vmem:[#allocation4] sm:$0xff]
    %v1513 = vld [vmem:[#allocation4 + $0x8] sm:$0xff]
    %v1514 = vld [vmem:[%s3] sm:$0xff]
    %v1515 = vld [vmem:[%s3 + $0x8] sm:$0xff]
    %v1516 = vld [vmem:[%s3 + $0x10] sm:$0xff]
    %v1517 = vld [vmem:[%s3 + $0x18] sm:$0xff]
    %v1519 = vsel %vm70, %v1512, 0
    %v1522 = vsel %vm70, %v1513, 0
    %1524 = vmatprep.subr.mxu0 0.0
    %1525 = vmatpush1.msra.mxu0 %v1514
    %1526 = vmatprep.subr.mxu0 0.0
    %1527 = vmatpush1.msra.mxu0 %v1515
    %1528 = vmatprep.subr.mxu0 0.0
    %1529 = vmatpush1.msra.mxu0 %v1516
    %1530 = vmatprep.subr.mxu0 0.0
    %1531 = vmatpush1.msra.mxu0 %v1517
    %1532 = vmatprep.subr.mxu0 0.0
    %1533 = vmatpush1.msra.mxu0 0.0
    %1534 = vmatprep.subr.mxu0 0.0
    %1535 = vmatpush1.msra.mxu0 0.0
    %1536 = vmatprep.subr.mxu0 0.0
    %1537 = vmatpush1.msra.mxu0 0.0
    %1538 = vmatprep.subr.mxu0 0.0
    %1539 = vmatpush1.msra.mxu0 0.0
    %1540 = vmatprep.subr.mxu0 0.0
    %1541 = vmatpush1.msra.mxu0 0.0
    %1542 = vmatprep.subr.mxu0 0.0
    %1543 = vmatpush1.msra.mxu0 0.0
    %1544 = vmatprep.subr.mxu0 0.0
    %1545 = vmatpush1.msra.mxu0 0.0
    %1546 = vmatprep.subr.mxu0 0.0
    %1547 = vmatpush1.msra.mxu0 0.0
    %1548 = vmatprep.subr.mxu0 0.0
    %1549 = vmatpush1.msra.mxu0 0.0
    %1550 = vmatprep.subr.mxu0 0.0
    %1551 = vmatpush1.msra.mxu0 0.0
    %1552 = vmatprep.subr.mxu0 0.0
    %1553 = vmatpush1.msra.mxu0 0.0
    %1554 = vmatprep.subr.mxu0 0.0
    %1555 = vmatpush1.msra.mxu0 0.0
    %1556 = vmatprep.subr.mxu0 0.0
    %1557 = vmatpush1.msra.mxu0 0.0
    %1558 = vmatprep.subr.mxu0 0.0
    %1559 = vmatpush1.msra.mxu0 0.0
    %1560 = vmatprep.subr.mxu0 0.0
    %1561 = vmatpush1.msra.mxu0 0.0
    %1562 = vmatprep.subr.mxu0 0.0
    %1563 = vmatpush1.msra.mxu0 0.0
    %1564 = vmatprep.subr.mxu0 0.0
    %1565 = vmatpush1.msra.mxu0 0.0
    %1566 = vmatprep.subr.mxu0 0.0
    %1567 = vmatpush1.msra.mxu0 0.0
    %1568 = vmatprep.subr.mxu0 0.0
    %1569 = vmatpush1.msra.mxu0 0.0
    %1570 = vmatprep.subr.mxu0 0.0
    %1571 = vmatpush1.msra.mxu0 0.0
    %1572 = vmatprep.subr.mxu0 0.0
    %1573 = vmatpush1.msra.mxu0 0.0
    %1574 = vmatprep.subr.mxu0 0.0
    %1575 = vmatpush1.msra.mxu0 0.0
    %1576 = vmatprep.subr.mxu0 0.0
    %1577 = vmatpush1.msra.mxu0 0.0
    %1578 = vmatprep.subr.mxu0 0.0
    %1579 = vmatpush1.msra.mxu0 0.0
    %1580 = vmatprep.subr.mxu0 0.0
    %1581 = vmatpush1.msra.mxu0 0.0
    %1582 = vmatprep.subr.mxu0 0.0
    %1583 = vmatpush1.msra.mxu0 0.0
    %1584 = vmatprep.subr.mxu0 0.0
    %1585 = vmatpush1.msra.mxu0 0.0
    %1586 = vmatprep.subr.mxu0 0.0
    %1587 = vmatpush1.msra.mxu0 0.0
    %1588 = vmatprep.mubr.f32.mxu0 0.0
    %1589 = vmatmul.mubr.f32.gmra.mrb[0].mxu0 %v1519
    %v1590 = vpop.f32.mrb[0].mxu0
    %v1591 = vadd.f32 0.0, %v1590
    %v1592 = vpop.f32.mrb[0].mxu0
    %1593 = vmatprep.mubr.f32.mxu0 0.0
    %1594 = vmatmul.mubr.f32.gmra.mrb[0].mxu0 %v1522
    %v1595 = vpop.f32.mrb[0].mxu0
    %v1596 = vadd.f32 0.0, %v1595
    %v1597 = vpop.f32.mrb[0].mxu0
    %1598 = vdwg.mxu0
    %v1599 = vadd.f32 %v1510, %v1591
    %v1600 = vadd.f32 %v1511, %v1596
    %1601 = vst.msk [vmem:[#allocation2] sm:$0xff] %vm70, %v1599
    %1602 = vst.msk [vmem:[#allocation2 + $0x8] sm:$0xff] %vm70, %v1600
    // Predicated region
    $region50: #{tpu_custom_call.1} parent=1 // pred_check
      %p1603 = pneg %p39
    $region51: #{tpu_custom_call.1} parent=1 // pred_check_branch
      %1605 = sbr.rel (%p1603) target = $region53
    $region52: #{tpu_custom_call.1} parent=1 // pred_region
      %v1606 = vld [vmem:[%s5] sm:$0x1]
      %v1607 = vld [vmem:[%s6] sm:$0x1]
      %v1608 = vld [vmem:[%s0] sm:$0xff]
      %v1609 = vld [vmem:[%s0 + $0x8] sm:$0xff]
      %v1610 = vld [vmem:[#allocation2] sm:$0xff]
      %v1611 = vld [vmem:[#allocation2 + $0x8] sm:$0xff]
      %v1612 = vsel %vm70, %v1610, 0.0
      %1613 = vadd.xlane.f32.xlu0 %v1612
      %v1614 = vpop.xlane.xlu0 %1613
      %v1615 = vsel %vm70, %v1611, 0.0
      %1616 = vadd.xlane.f32.xlu0 %v1615
      %v1617 = vpop.xlane.xlu0 %1616
      %v1618 = vrcp.pop 32.0
      %v1619 = vmul.f32 %v1614, %v1618
      %v1620 = vmul.f32 %v1617, %v1618
      %v1621 = vsub.f32 %v1610, %v1619
      %v1622 = vsub.f32 %v1611, %v1620
      %v1623 = vmul.f32 %v1621, %v1621
      %v1624 = vmul.f32 %v1622, %v1622
      %v1625 = vsel %vm70, %v1623, 0.0
      %1626 = vadd.xlane.f32.xlu0 %v1625
      %v1627 = vpop.xlane.xlu0 %1626
      %v1628 = vsel %vm70, %v1624, 0.0
      %1629 = vadd.xlane.f32.xlu0 %v1628
      %v1630 = vpop.xlane.xlu0 %1629
      %v1631 = vmul.f32 %v1627, %v1618
      %v1632 = vmul.f32 %v1630, %v1618
      %v1633 = vadd.f32 %v1631, 1e-05
      %v1634 = vadd.f32 %v1632, 1e-05
      %v1635 = vrsqrt.pop %v1633
      %v1636 = vrsqrt.pop %v1634
      %v1637 = vmul.f32 %v1621, %v1635
      %v1638 = vmul.f32 %v1622, %v1636
      %v1640 = vlaneseq
      %v1641 = vshrl.u32 %v1640, 7
      %v1642 = vsub.s32 0, %v1641
      %v1643 = vrot.slane %v1606, %v1642
      %v1645 = vmul.f32 %v1637, %v1643
      %v1646 = vmul.f32 %v1638, %v1643
      %v1648 = vlaneseq
      %v1649 = vshrl.u32 %v1648, 7
      %v1650 = vsub.s32 0, %v1649
      %v1651 = vrot.slane %v1607, %v1650
      %v1653 = vadd.f32 %v1645, %v1651
      %v1654 = vadd.f32 %v1646, %v1651
      %v1655 = vadd.f32 %v1608, %v1653
      %v1656 = vadd.f32 %v1609, %v1654
      %v1657 = vld [vmem:[%s10] sm:$0x1]
      %v1659 = vlaneseq
      %v1660 = vshrl.u32 %v1659, 7
      %v1661 = vsub.s32 0, %v1660
      %v1662 = vrot.slane %v1657, %v1661
      %v1664 = vld [vmem:[%s7] sm:$0xff]
      %v1665 = vld [vmem:[%s7 + $0x8] sm:$0xff]
      %v1666 = vld [vmem:[%s7 + $0x10] sm:$0xff]
      %v1667 = vld [vmem:[%s7 + $0x18] sm:$0xff]
      %v1668 = vld [vmem:[%s8] sm:$0x1]
      %v1670 = vlaneseq
      %v1671 = vshrl.u32 %v1670, 7
      %v1672 = vsub.s32 0, %v1671
      %v1673 = vrot.slane %v1668, %v1672
      %v1676 = vsel %vm70, %v1655, 0
      %v1679 = vsel %vm70, %v1656, 0
      %1681 = vmatprep.subr.mxu0 0.0
      %1682 = vmatpush1.msra.mxu0 %v1664
      %1683 = vmatprep.subr.mxu0 0.0
      %1684 = vmatpush1.msra.mxu0 %v1665
      %1685 = vmatprep.subr.mxu0 0.0
      %1686 = vmatpush1.msra.mxu0 %v1666
      %1687 = vmatprep.subr.mxu0 0.0
      %1688 = vmatpush1.msra.mxu0 %v1667
      %1689 = vmatprep.subr.mxu0 0.0
      %1690 = vmatpush1.msra.mxu0 0.0
      %1691 = vmatprep.subr.mxu0 0.0
      %1692 = vmatpush1.msra.mxu0 0.0
      %1693 = vmatprep.subr.mxu0 0.0
      %1694 = vmatpush1.msra.mxu0 0.0
      %1695 = vmatprep.subr.mxu0 0.0
      %1696 = vmatpush1.msra.mxu0 0.0
      %1697 = vmatprep.subr.mxu0 0.0
      %1698 = vmatpush1.msra.mxu0 0.0
      %1699 = vmatprep.subr.mxu0 0.0
      %1700 = vmatpush1.msra.mxu0 0.0
      %1701 = vmatprep.subr.mxu0 0.0
      %1702 = vmatpush1.msra.mxu0 0.0
      %1703 = vmatprep.subr.mxu0 0.0
      %1704 = vmatpush1.msra.mxu0 0.0
      %1705 = vmatprep.subr.mxu0 0.0
      %1706 = vmatpush1.msra.mxu0 0.0
      %1707 = vmatprep.subr.mxu0 0.0
      %1708 = vmatpush1.msra.mxu0 0.0
      %1709 = vmatprep.subr.mxu0 0.0
      %1710 = vmatpush1.msra.mxu0 0.0
      %1711 = vmatprep.subr.mxu0 0.0
      %1712 = vmatpush1.msra.mxu0 0.0
      %1713 = vmatprep.subr.mxu0 0.0
      %1714 = vmatpush1.msra.mxu0 0.0
      %1715 = vmatprep.subr.mxu0 0.0
      %1716 = vmatpush1.msra.mxu0 0.0
      %1717 = vmatprep.subr.mxu0 0.0
      %1718 = vmatpush1.msra.mxu0 0.0
      %1719 = vmatprep.subr.mxu0 0.0
      %1720 = vmatpush1.msra.mxu0 0.0
      %1721 = vmatprep.subr.mxu0 0.0
      %1722 = vmatpush1.msra.mxu0 0.0
      %1723 = vmatprep.subr.mxu0 0.0
      %1724 = vmatpush1.msra.mxu0 0.0
      %1725 = vmatprep.subr.mxu0 0.0
      %1726 = vmatpush1.msra.mxu0 0.0
      %1727 = vmatprep.subr.mxu0 0.0
      %1728 = vmatpush1.msra.mxu0 0.0
      %1729 = vmatprep.subr.mxu0 0.0
      %1730 = vmatpush1.msra.mxu0 0.0
      %1731 = vmatprep.subr.mxu0 0.0
      %1732 = vmatpush1.msra.mxu0 0.0
      %1733 = vmatprep.subr.mxu0 0.0
      %1734 = vmatpush1.msra.mxu0 0.0
      %1735 = vmatprep.subr.mxu0 0.0
      %1736 = vmatpush1.msra.mxu0 0.0
      %1737 = vmatprep.subr.mxu0 0.0
      %1738 = vmatpush1.msra.mxu0 0.0
      %1739 = vmatprep.subr.mxu0 0.0
      %1740 = vmatpush1.msra.mxu0 0.0
      %1741 = vmatprep.subr.mxu0 0.0
      %1742 = vmatpush1.msra.mxu0 0.0
      %1743 = vmatprep.subr.mxu0 0.0
      %1744 = vmatpush1.msra.mxu0 0.0
      %1745 = vmatprep.mubr.f32.mxu0 0.0
      %1746 = vmatmul.mubr.f32.gmra.mrb[0].mxu0 %v1676
      %v1747 = vpop.f32.mrb[0].mxu0
      %v1748 = vadd.f32 %v1673, %v1747
      %v1749 = vpop.f32.mrb[0].mxu0
      %1750 = vmatprep.mubr.f32.mxu0 0.0
      %1751 = vmatmul.mubr.f32.gmra.mrb[0].mxu0 %v1679
      %v1752 = vpop.f32.mrb[0].mxu0
      %v1753 = vadd.f32 %v1673, %v1752
      %v1754 = vpop.f32.mrb[0].mxu0
      %1755 = vdwg.mxu0
      %v1756 = vmul.f32 %v1748, 0.5
      %v1757 = vmul.f32 %v1753, 0.5
      %v1758 = vmul.f32 %v1748, 0.70710677
      %v1759 = vmul.f32 %v1753, 0.70710677
      %v1760 = verf.f32.pop %v1758
      %v1761 = verf.f32.pop %v1759
      %v1762 = vadd.f32 %v1760, 1.0
      %v1763 = vadd.f32 %v1761, 1.0
      %v1764 = vmul.f32 %v1756, %v1762
      %v1765 = vmul.f32 %v1757, %v1763
      %v1766 = vld [vmem:[%s9] sm:$0xff]
      %v1767 = vld [vmem:[%s9 + $0x8] sm:$0xff]
      %v1768 = vld [vmem:[%s9 + $0x10] sm:$0xff]
      %v1769 = vld [vmem:[%s9 + $0x18] sm:$0xff]
      %v1770 = vld [vmem:[%s9 + $0x20] sm:$0xff]
      %v1771 = vld [vmem:[%s9 + $0x28] sm:$0xff]
      %v1772 = vld [vmem:[%s9 + $0x30] sm:$0xff]
      %v1773 = vld [vmem:[%s9 + $0x38] sm:$0xff]
      %v1774 = vld [vmem:[%s9 + $0x40] sm:$0xff]
      %v1775 = vld [vmem:[%s9 + $0x48] sm:$0xff]
      %v1776 = vld [vmem:[%s9 + $0x50] sm:$0xff]
      %v1777 = vld [vmem:[%s9 + $0x58] sm:$0xff]
      %v1778 = vld [vmem:[%s9 + $0x60] sm:$0xff]
      %v1779 = vld [vmem:[%s9 + $0x68] sm:$0xff]
      %v1780 = vld [vmem:[%s9 + $0x70] sm:$0xff]
      %v1781 = vld [vmem:[%s9 + $0x78] sm:$0xff]
      %1782 = vmatprep.subr.mxu0 0.0
      %1783 = vmatpush1.msra.mxu0 %v1766
      %1784 = vmatprep.subr.mxu0 0.0
      %1785 = vmatpush1.msra.mxu0 %v1767
      %1786 = vmatprep.subr.mxu0 0.0
      %1787 = vmatpush1.msra.mxu0 %v1768
      %1788 = vmatprep.subr.mxu0 0.0
      %1789 = vmatpush1.msra.mxu0 %v1769
      %1790 = vmatprep.subr.mxu0 0.0
      %1791 = vmatpush1.msra.mxu0 %v1770
      %1792 = vmatprep.subr.mxu0 0.0
      %1793 = vmatpush1.msra.mxu0 %v1771
      %1794 = vmatprep.subr.mxu0 0.0
      %1795 = vmatpush1.msra.mxu0 %v1772
      %1796 = vmatprep.subr.mxu0 0.0
      %1797 = vmatpush1.msra.mxu0 %v1773
      %1798 = vmatprep.subr.mxu0 0.0
      %1799 = vmatpush1.msra.mxu0 %v1774
      %1800 = vmatprep.subr.mxu0 0.0
      %1801 = vmatpush1.msra.mxu0 %v1775
      %1802 = vmatprep.subr.mxu0 0.0
      %1803 = vmatpush1.msra.mxu0 %v1776
      %1804 = vmatprep.subr.mxu0 0.0
      %1805 = vmatpush1.msra.mxu0 %v1777
      %1806 = vmatprep.subr.mxu0 0.0
      %1807 = vmatpush1.msra.mxu0 %v1778
      %1808 = vmatprep.subr.mxu0 0.0
      %1809 = vmatpush1.msra.mxu0 %v1779
      %1810 = vmatprep.subr.mxu0 0.0
      %1811 = vmatpush1.msra.mxu0 %v1780
      %1812 = vmatprep.subr.mxu0 0.0
      %1813 = vmatpush1.msra.mxu0 %v1781
      %1814 = vmatprep.subr.mxu0 0.0
      %1815 = vmatpush1.msra.mxu0 0.0
      %1816 = vmatprep.subr.mxu0 0.0
      %1817 = vmatpush1.msra.mxu0 0.0
      %1818 = vmatprep.subr.mxu0 0.0
      %1819 = vmatpush1.msra.mxu0 0.0
      %1820 = vmatprep.subr.mxu0 0.0
      %1821 = vmatpush1.msra.mxu0 0.0
      %1822 = vmatprep.subr.mxu0 0.0
      %1823 = vmatpush1.msra.mxu0 0.0
      %1824 = vmatprep.subr.mxu0 0.0
      %1825 = vmatpush1.msra.mxu0 0.0
      %1826 = vmatprep.subr.mxu0 0.0
      %1827 = vmatpush1.msra.mxu0 0.0
      %1828 = vmatprep.subr.mxu0 0.0
      %1829 = vmatpush1.msra.mxu0 0.0
      %1830 = vmatprep.subr.mxu0 0.0
      %1831 = vmatpush1.msra.mxu0 0.0
      %1832 = vmatprep.subr.mxu0 0.0
      %1833 = vmatpush1.msra.mxu0 0.0
      %1834 = vmatprep.subr.mxu0 0.0
      %1835 = vmatpush1.msra.mxu0 0.0
      %1836 = vmatprep.subr.mxu0 0.0
      %1837 = vmatpush1.msra.mxu0 0.0
      %1838 = vmatprep.subr.mxu0 0.0
      %1839 = vmatpush1.msra.mxu0 0.0
      %1840 = vmatprep.subr.mxu0 0.0
      %1841 = vmatpush1.msra.mxu0 0.0
      %1842 = vmatprep.subr.mxu0 0.0
      %1843 = vmatpush1.msra.mxu0 0.0
      %1844 = vmatprep.subr.mxu0 0.0
      %1845 = vmatpush1.msra.mxu0 0.0
      %1846 = vmatprep.mubr.f32.mxu0 0.0
      %1847 = vmatmul.mubr.f32.gmra.mrb[0].mxu0 %v1764
      %v1848 = vpop.f32.mrb[0].mxu0
      %v1849 = vadd.f32 0.0, %v1848
      %v1850 = vpop.f32.mrb[0].mxu0
      %1851 = vmatprep.mubr.f32.mxu0 0.0
      %1852 = vmatmul.mubr.f32.gmra.mrb[0].mxu0 %v1765
      %v1853 = vpop.f32.mrb[0].mxu0
      %v1854 = vadd.f32 0.0, %v1853
      %v1855 = vpop.f32.mrb[0].mxu0
      %1856 = vdwg.mxu0
      %v1857 = vadd.f32 %v1662, %v1849
      %v1858 = vadd.f32 %v1662, %v1854
      %v1859 = vsel %vm70, %v1857, 0.0
      %1860 = vadd.xlane.f32.xlu0 %v1859
      %v1861 = vpop.xlane.xlu0 %1860
      %v1862 = vsel %vm70, %v1858, 0.0
      %1863 = vadd.xlane.f32.xlu0 %v1862
      %v1864 = vpop.xlane.xlu0 %1863
      %v1865 = vmul.f32 %v1861, %v1618
      %v1866 = vmul.f32 %v1864, %v1618
      %v1867 = vsub.f32 %v1857, %v1865
      %v1868 = vsub.f32 %v1858, %v1866
      %v1869 = vmul.f32 %v1867, %v1867
      %v1870 = vmul.f32 %v1868, %v1868
      %v1871 = vsel %vm70, %v1869, 0.0
      %1872 = vadd.xlane.f32.xlu0 %v1871
      %v1873 = vpop.xlane.xlu0 %1872
      %v1874 = vsel %vm70, %v1870, 0.0
      %1875 = vadd.xlane.f32.xlu0 %v1874
      %v1876 = vpop.xlane.xlu0 %1875
      %v1877 = vmul.f32 %v1873, %v1618
      %v1878 = vmul.f32 %v1876, %v1618
      %v1879 = vadd.f32 %v1877, 1e-05
      %v1880 = vadd.f32 %v1878, 1e-05
      %v1881 = vrsqrt.pop %v1879
      %v1882 = vrsqrt.pop %v1880
      %v1883 = vmul.f32 %v1867, %v1881
      %v1884 = vmul.f32 %v1868, %v1882
      %v1885 = vmul.f32 %v1883, %v1643
      %v1886 = vmul.f32 %v1884, %v1643
      %v1887 = vadd.f32 %v1885, %v1651
      %v1888 = vadd.f32 %v1886, %v1651
      %v1889 = vadd.f32 %v1655, %v1887
      %v1890 = vadd.f32 %v1656, %v1888
      %1891 = vst.msk [vmem:[#allocation5] sm:$0xff] %vm70, %v1889
      %1892 = vst.msk [vmem:[#allocation5 + $0x8] sm:$0xff] %vm70, %v1890
    $region53: #{tpu_custom_call.1} parent=1 // pred_fallthru
      _
    // Predicated region
    $region54: #{tpu_custom_call.1} parent=1 // pred_check
      _
    $region55: #{tpu_custom_call.1} parent=1 // pred_check_branch
      %1894 = sbr.rel (0) target = $region57
    $region56: #{tpu_custom_call.1} parent=1 // pred_region
      %s1896 = ssub.s32 256, 256
      %1897 = vsyncadd [#allocation6], %s1896
      %s1898 = sshll.u32 [#allocation5], 4
      %s1899 = int_to_ptr.vmem [resolvable:$true] %s1898
      %1904 = dma.vmem_to_hbm [thread:$0]  %s1899, 256, %s11, [#allocation6], 128, 128, 8
    $region57: #{tpu_custom_call.1} parent=1 // pred_fallthru
      _
    // Predicated region
    $region58: #{tpu_custom_call.1} parent=1 // pred_check
      _
    $region59: #{tpu_custom_call.1} parent=1 // pred_check_branch
      %1906 = sbr.rel (0) target = $region61
    $region60: #{tpu_custom_call.1} parent=1 // pred_region
      %1907 = dma.done [#allocation6], 256
    $region61: #{tpu_custom_call.1} parent=1 // pred_fallthru
      _
    %1908 = vsyncpa [#allocation6], 1

</llo_original>
